<compile_context>
chip_gen: v7x
topology: tpu7x:2x2x1
jax: 0.10.0
libtpu: 0.0.40
codegen_flags: <defaults>
</compile_context>

<pallas_src>
import jax
import jax.numpy as jnp
from jax import lax
from jax.experimental import pallas as pl
from jax.experimental.pallas import tpu as pltpu


# ----------------------------------------------------------------------------
# Config (mirrors config['method']['deq_cal'] of the PyTorch module)
# ----------------------------------------------------------------------------
GAMMA = 0.5          # x_gamma
ALPHA = 0.5          # x_alpha
SIGMA = 5.0 / 255.0  # warmup.x_sigma / 255
HIDDEN = 16          # hidden channels of the synthetic net_x CNN
PTILE = 512          # lane tile for the CNN spatial axis (multiple of 128)


def _chip_defaults():
    """(coil_tile, vmem_limit_bytes) per TPU generation."""
    try:
        kind = (jax.devices()[0].device_kind or "").lower()
    except Exception:
        kind = ""
    if any(s in kind for s in ("v2", "v3", "v4", "v5")):
        return 8, 96 * 1024 * 1024        # 128 MiB VMEM parts, deeper coil tile
    if "v6" in kind:
        return 4, 96 * 1024 * 1024        # 128 MiB VMEM
    return 4, 48 * 1024 * 1024            # v7x (64 MiB / TC) or unknown: be safe


# ----------------------------------------------------------------------------
# Ortho DFT matrix (symmetric, no fftshift) and its block-complex forms
# ----------------------------------------------------------------------------
def _dft_matrix(n):
    k = jnp.arange(n, dtype=jnp.float32)
    prod = jnp.mod(jnp.outer(k, k), jnp.float32(n))     # reduce arg for accuracy
    ang = -2.0 * jnp.pi * prod / n
    s = 1.0 / jnp.sqrt(jnp.float32(n))
    return jnp.cos(ang) * s, jnp.sin(ang) * s


# ----------------------------------------------------------------------------
# Data-consistency kernel: x <- x - gamma * ftran(fmult(x,theta,mask) - y, ...)
# ----------------------------------------------------------------------------
def _make_dc_kernel(CT, W, H, gamma):

    def kernel(xr_ref, xi_ref, thr_ref, thi_ref, m2t_ref, myrt_ref, myit_ref,
               fb_ref, fbc_ref, or_ref, oi_ref):
        c = pl.program_id(1)

        xr = xr_ref[0]              # (W, H)
        xi = xi_ref[0]
        thr = thr_ref[0]            # (CT, W, H)
        thi = thi_ref[0]
        fb = fb_ref[...]            # (2W, 2W) bf16   [[Fr, Fi], [-Fi, Fr]]
        fbc = fbc_ref[...]          # (2W, 2W) bf16   [[Fr, -Fi], [Fi, Fr]]

        def bdot(ar, ai, rhs):
            """Coil-batched complex right-multiply via one block-complex matmul."""
            ct, m, n = ar.shape
            lhs = jnp.concatenate([ar, ai], axis=-1).reshape(ct * m, 2 * n)
            res = jnp.dot(lhs.astype(jnp.bfloat16), rhs,
                          preferred_element_type=jnp.float32)
            res = res.reshape(ct, m, 2 * n)
            return res[:, :, :n], res[:, :, n:]

        def tr(a):
            return jnp.transpose(a, (0, 2, 1))   # single batched transpose

        # z_c = theta_c * x
        zr = thr * xr[None] - thi * xi[None]
        zi = thr * xi[None] + thi * xr[None]

        # FFT along the last axis, then along the first (on transposed slabs):
        #   K^T = (F Z F)^T
        br, bi = bdot(zr, zi, fb)                    # (CT, W, H)
        ktr, kti = bdot(tr(br), tr(bi), fb)          # (CT, H, W) == FFT2(z)^T

        # masked residual (transposed): R^T = (m^2)^T * K^T - (m*y)^T
        m2t = m2t_ref[0]                             # (H, W)
        rtr = m2t[None] * ktr - myrt_ref[0]
        rti = m2t[None] * kti - myit_ref[0]

        # IFFT2 back to (W, H) orientation: D = conj(F) R conj(F)
        cr, ci = bdot(rtr, rti, fbc)                 # (CT, H, W)
        dr, di = bdot(tr(cr), tr(ci), fbc)           # (CT, W, H)

        # partial dc for this coil tile: sum_c conj(theta_c) * D_c
        pr = jnp.sum(thr * dr + thi * di, axis=0)
        pi = jnp.sum(thr * di - thi * dr, axis=0)

        # accumulate directly into the resident output block
        @pl.when(c == 0)
        def _first():
            or_ref[0] = xr - gamma * pr
            oi_ref[0] = xi - gamma * pi

        @pl.when(c > 0)
        def _rest():
            or_ref[0] = or_ref[0] - gamma * pr
            oi_ref[0] = oi_ref[0] - gamma * pi

    return kernel


def dc_step(xr, xi, thr, thi, mask, yr, yi, gamma, coil_tile, vmem_limit):
    B, C, W, H = thr.shape
    assert W == H, "square images assumed (single DFT matrix)"
    ct = max(1, min(coil_tile, C))
    while C % ct:
        ct -= 1          # TODO(synk): pad the coil dim instead for prime C

    fr, fi = _dft_matrix(W)
    fb = jnp.concatenate(
        [jnp.concatenate([fr, fi], axis=1),
         jnp.concatenate([-fi, fr], axis=1)], axis=0).astype(jnp.bfloat16)
    fbc = jnp.concatenate(
        [jnp.concatenate([fr, -fi], axis=1),
         jnp.concatenate([fi, fr], axis=1)], axis=0).astype(jnp.bfloat16)

    m2t = jnp.transpose(mask * mask, (0, 2, 1))               # (B, H, W)
    myrt = jnp.transpose(mask[:, None] * yr, (0, 1, 3, 2))    # (B, C, H, W)
    myit = jnp.transpose(mask[:, None] * yi, (0, 1, 3, 2))

    img = pl.BlockSpec((1, W, H), lambda b, c: (b, 0, 0))
    img_t = pl.BlockSpec((1, H, W), lambda b, c: (b, 0, 0))
    coil = pl.BlockSpec((1, ct, W, H), lambda b, c: (b, c, 0, 0))
    coil_t = pl.BlockSpec((1, ct, H, W), lambda b, c: (b, c, 0, 0))
    mat = pl.BlockSpec((2 * W, 2 * W), lambda b, c: (0, 0))

    flops = 32 * B * C * W * W * W
    bytes_accessed = 4 * (5 * B * W * H + 4 * B * C * W * H) + 2 * 2 * 4 * W * W

    return pl.pallas_call(
        _make_dc_kernel(ct, W, H, gamma),
        out_shape=(jax.ShapeDtypeStruct((B, W, H), jnp.float32),
                   jax.ShapeDtypeStruct((B, W, H), jnp.float32)),
        grid=(B, C // ct),
        in_specs=[img, img, coil, coil, img_t, coil_t, coil_t, mat, mat],
        out_specs=(img, img),
        compiler_params=pltpu.CompilerParams(
            dimension_semantics=("parallel", "arbitrary"),
            vmem_limit_bytes=vmem_limit),
        cost_estimate=pl.CostEstimate(flops=flops, transcendentals=0,
                                      bytes_accessed=bytes_accessed),
    )(xr, xi, thr, thi, m2t, myrt, myit, fb, fbc)


# ----------------------------------------------------------------------------
# Fused 3-layer 3x3 CNN prior + alpha blend (single per-batch kernel).
# Activations stay in VMEM; each conv is 9 lane-shifted (cout,cin)@(cin,PT)
# dots per 128-aligned spatial tile, accumulated in a local jnp value.
# ----------------------------------------------------------------------------
def _make_cnn_kernel(Hp, P_pad, PT, SLACK, P2S, hidden, alpha):
    offs = [(ky - 1) * Hp + (kx - 1) for ky in range(3) for kx in range(3)]
    NT = P_pad // PT

    def kernel(x0_ref, w1_ref, b1_ref, w2_ref, b2_ref, w3_ref, b3_ref, int_ref,
               out_ref, x0b, act_a, act_b):
        # one-shot bf16 cast of the (3, P2S) layer-1 input (not 9x per tap)
        x0b[...] = x0_ref[0].astype(jnp.bfloat16)

        # zero the slack halos of the activation planes once
        zs = jnp.zeros((hidden, SLACK), jnp.bfloat16)
        act_a[:, 0:SLACK] = zs
        act_a[:, SLACK + P_pad:P2S] = zs
        act_b[:, 0:SLACK] = zs
        act_b[:, SLACK + P_pad:P2S] = zs

        w1 = [w1_ref[t] for t in range(9)]
        w2 = [w2_ref[t] for t in range(9)]
        w3 = [w3_ref[t] for t in range(9)]
        b1 = b1_ref[...]
        b2 = b2_ref[...]
        b3 = b3_ref[...]

        def conv_tile(src, ws, ts):
            acc = None
            for t, off in enumerate(offs):
                s = SLACK + ts + off
                tap = src[:, s:s + PT]                       # (cin, PT) bf16
                contrib = jnp.dot(ws[t], tap,
                                  preferred_element_type=jnp.float32)
                acc = contrib if acc is None else acc + contrib
            return acc                                       # (cout, PT) f32

        # layer 1: (xr, xi, sigma) -> hidden, relu, interior mask
        for ti in range(NT):
            ts = ti * PT
            msk = int_ref[:, ts:ts + PT]
            h = jnp.maximum(conv_tile(x0b, w1, ts) + b1, 0.0) * msk
            act_a[:, SLACK + ts:SLACK + ts + PT] = h.astype(jnp.bfloat16)

        # layer 2
        for ti in range(NT):
            ts = ti * PT
            msk = int_ref[:, ts:ts + PT]
            h = jnp.maximum(conv_tile(act_a, w2, ts) + b2, 0.0) * msk
            act_b[:, SLACK + ts:SLACK + ts + PT] = h.astype(jnp.bfloat16)

        # layer 3 (no relu) fused with the alpha blend against the DC image
        for ti in range(NT):
            ts = ti * PT
            prior = conv_tile(act_b, w3, ts) + b3            # (2, PT)
            xd = x0_ref[0, 0:2, SLACK + ts:SLACK + ts + PT]  # f32 DC image
            out_ref[0, :, ts:ts + PT] = alpha * prior + (1.0 - alpha) * xd

    return kernel


def cnn_prior_blend(xdr, xdi, params, alpha, sigma, vmem_limit, hidden=HIDDEN):
    B, W, H = xdr.shape
    Wp, Hp = W + 2, H + 2
    P = Wp * Hp
    PT = min(PTILE, ((P + 127) // 128) * 128)
    P_pad = ((P + PT - 1) // PT) * PT                        # multiple of PT/128
    SLACK = ((Hp + 1 + 127) // 128) * 128                    # lane-aligned halo slack
    P2S = P_pad + 2 * SLACK

    (w1, b1), (w2, b2), (w3, b3) = params

    def prep_w(w):
        co, ci = w.shape[0], w.shape[1]
        return jnp.transpose(w, (2, 3, 0, 1)).reshape(9, co, ci).astype(jnp.bfloat16)

    w1b, w2b, w3b = prep_w(w1), prep_w(w2), prep_w(w3)
    b1c = b1.reshape(hidden, 1).astype(jnp.float32)
    b2c = b2.reshape(hidden, 1).astype(jnp.float32)
    b3c = b3.reshape(2, 1).astype(jnp.float32)

    # TODO(synk): fuse this pad/flatten (and the sigma channel) into the kernel
    # via an in-kernel row scatter to remove the extra HBM pass.
    sig = jnp.full((B, 1, W, H), sigma, jnp.float32)
    h0 = jnp.concatenate([xdr[:, None], xdi[:, None], sig], axis=1)   # (B,3,W,H)
    h0 = jnp.pad(h0, ((0, 0), (0, 0), (1, 1), (1, 1)))                # zero ring
    x0 = jnp.pad(h0.reshape(B, 3, P),
                 ((0, 0), (0, 0), (SLACK, SLACK + P_pad - P)))

    row_ok = (jnp.arange(Wp) >= 1) & (jnp.arange(Wp) <= W)
    col_ok = (jnp.arange(Hp) >= 1) & (jnp.arange(Hp) <= H)
    interior = (row_ok[:, None] & col_ok[None, :]).astype(jnp.float32).reshape(1, P)
    interior = jnp.pad(interior, ((0, 0), (0, P_pad - P)))

    def const_spec(shape):
        return pl.BlockSpec(shape, lambda b: (0,) * len(shape))

    flops = B * 18 * P_pad * (3 * hidden + hidden * hidden + 2 * hidden)
    bytes_accessed = 4 * B * (3 * P2S + 2 * P_pad) + 4 * P_pad \
        + 2 * 9 * (3 * hidden + hidden * hidden + 2 * hidden)

    out = pl.pallas_call(
        _make_cnn_kernel(Hp, P_pad, PT, SLACK, P2S, hidden, alpha),
        out_shape=jax.ShapeDtypeStruct((B, 2, P_pad), jnp.float32),
        grid=(B,),
        in_specs=[pl.BlockSpec((1, 3, P2S), lambda b: (b, 0, 0)),
                  const_spec((9, hidden, 3)), const_spec((hidden, 1)),
                  const_spec((9, hidden, hidden)), const_spec((hidden, 1)),
                  const_spec((9, 2, hidden)), const_spec((2, 1)),
                  const_spec((1, P_pad))],
        out_specs=pl.BlockSpec((1, 2, P_pad), lambda b: (b, 0, 0)),
        scratch_shapes=[pltpu.VMEM((3, P2S), jnp.bfloat16),
                        pltpu.VMEM((hidden, P2S), jnp.bfloat16),
                        pltpu.VMEM((hidden, P2S), jnp.bfloat16)],
        compiler_params=pltpu.CompilerParams(
            dimension_semantics=("parallel",),
            vmem_limit_bytes=vmem_limit),
        cost_estimate=pl.CostEstimate(flops=flops, transcendentals=0,
                                      bytes_accessed=bytes_accessed),
    )(x0, w1b, b1c, w2b, b2c, w3b, b3c, interior)

    out = out[:, :, :P].reshape(B, 2, Wp, Hp)[:, :, 1:W + 1, 1:H + 1]
    return out[:, 0] + 1j * out[:, 1]


# ----------------------------------------------------------------------------
# Synthetic net_x
# ----------------------------------------------------------------------------
def init_cnn_params(key, cin=3, hidden=HIDDEN, cout=2):
    # TODO(synk): net_x architecture is not specified by the reference module;
    # we use a small 3-layer sigma-conditioned CNN (FFDNet-style noise map).
    k1, k2, k3 = jax.random.split(key, 3)

    def conv_init(k, co, ci):
        std = (2.0 / (ci * 9)) ** 0.5
        w = jax.random.normal(k, (co, ci, 3, 3), jnp.float32) * std
        return w, jnp.zeros((co,), jnp.float32)

    return (conv_init(k1, hidden, cin),
            conv_init(k2, hidden, hidden),
            conv_init(k3, cout, hidden))


# ----------------------------------------------------------------------------
# ImageUpdate.forward
# ----------------------------------------------------------------------------
def image_update_forward(x, theta, mask, y, params,
                         gamma=GAMMA, alpha=ALPHA, sigma=SIGMA):
    coil_tile, vmem_limit = _chip_defaults()

    xr = jnp.real(x).astype(jnp.float32)
    xi = jnp.imag(x).astype(jnp.float32)
    thr = jnp.real(theta).astype(jnp.float32)
    thi = jnp.imag(theta).astype(jnp.float32)
    yr = jnp.real(y).astype(jnp.float32)
    yi = jnp.imag(y).astype(jnp.float32)
    mask = mask.astype(jnp.float32)

    # x <- x - gamma * ftran(fmult(x, theta, mask) - y, theta, mask)
    xdr, xdi = dc_step(xr, xi, thr, thi, mask, yr, yi, gamma,
                       coil_tile, vmem_limit)

    # x_hat = alpha * denoise_complex(x) + (1 - alpha) * x   (fused in kernel)
    return cnn_prior_blend(xdr, xdi, params, alpha, sigma, vmem_limit)


# ----------------------------------------------------------------------------
# Pure-JAX reference (for correctness check)
# ----------------------------------------------------------------------------
def image_update_reference(x, theta, mask, y, params,
                           gamma=GAMMA, alpha=ALPHA, sigma=SIGMA):
    m = mask[:, None]
    kspace = m * jnp.fft.fft2(theta * x[:, None], norm='ortho')
    res = kspace - y
    dc = jnp.sum(jnp.conj(theta) * jnp.fft.ifft2(m * res, norm='ortho'), axis=1)
    x2 = x - gamma * dc

    sig = jnp.full(x2.real.shape, sigma, jnp.float32)
    h = jnp.stack([x2.real, x2.imag, sig], axis=1).astype(jnp.float32)
    (w1, b1), (w2, b2), (w3, b3) = params

    def conv(z, w, b):
        o = lax.conv_general_dilated(z, w, (1, 1), 'SAME',
                                     dimension_numbers=('NCHW', 'OIHW', 'NCHW'),
                                     precision=lax.Precision.HIGHEST)
        return o + b[None, :, None, None]

    h = jax.nn.relu(conv(h, w1, b1))
    h = jax.nn.relu(conv(h, w2, b2))
    h = conv(h, w3, b3)
    prior = h[:, 0] + 1j * h[:, 1]
    return alpha * prior + (1.0 - alpha) * x2


if __name__ == "__main__":
    B, C, W, H = 2, 4, 32, 32
    key = jax.random.PRNGKey(0)
    ks = jax.random.split(key, 8)

    x = (jax.random.normal(ks[0], (B, W, H)) +
         1j * jax.random.normal(ks[1], (B, W, H))).astype(jnp.complex64)
    theta = (jax.random.normal(ks[2], (B, C, W, H)) +
             1j * jax.random.normal(ks[3], (B, C, W, H))).astype(jnp.complex64)
    theta = theta / jnp.sqrt(jnp.sum(jnp.abs(theta) ** 2, axis=1, keepdims=True))
    mask = (jax.random.uniform(ks[4], (B, W, H)) > 0.5).astype(jnp.float32)
    y = (jax.random.normal(ks[5], (B, C, W, H)) +
         1j * jax.random.normal(ks[6], (B, C, W, H))).astype(jnp.complex64)
    y = mask[:, None] * y
    params = init_cnn_params(ks[7])

    out = image_update_forward(x, theta, mask, y, params)
    out = jax.block_until_ready(out)

    ref = image_update_reference(x, theta, mask, y, params)
    rel_err = float(jnp.max(jnp.abs(out - ref)) / (jnp.max(jnp.abs(ref)) + 1e-8))

    assert out.shape == (B, W, H)
    assert bool(jnp.all(jnp.isfinite(jnp.abs(out))))
    assert rel_err < 5e-2, f"mismatch vs reference: rel err {rel_err:.3e}"
    print("KERNEL_OK")
</pallas_src>

<mosaic_0001>
module attributes {stable_mosaic.version = 11 : i64} {
  func.func @kernel(%arg0: i32, %arg1: i32, %arg2: memref<1x32x32xf32, #tpu.memory_space<vmem>>, %arg3: memref<1x32x32xf32, #tpu.memory_space<vmem>>, %arg4: memref<1x4x32x32xf32, #tpu.memory_space<vmem>>, %arg5: memref<1x4x32x32xf32, #tpu.memory_space<vmem>>, %arg6: memref<1x32x32xf32, #tpu.memory_space<vmem>>, %arg7: memref<1x4x32x32xf32, #tpu.memory_space<vmem>>, %arg8: memref<1x4x32x32xf32, #tpu.memory_space<vmem>>, %arg9: memref<64x64xbf16, #tpu.memory_space<vmem>>, %arg10: memref<64x64xbf16, #tpu.memory_space<vmem>>, %arg11: memref<1x32x32xf32, #tpu.memory_space<vmem>>, %arg12: memref<1x32x32xf32, #tpu.memory_space<vmem>>) attributes {dimension_semantics = [#tpu.dimension_semantics<parallel>, #tpu.dimension_semantics<arbitrary>], iteration_bounds = array<i64: 2, 1>, scalar_prefetch = 0 : i64, scratch_operands = 0 : i64, tpu.core_type = #tpu.core_type<tc>, window_params = [{transform_indices = @transform_0, window_bounds = array<i64: 1, 32, 32>}, {transform_indices = @transform_1, window_bounds = array<i64: 1, 32, 32>}, {transform_indices = @transform_2, window_bounds = array<i64: 1, 4, 32, 32>}, {transform_indices = @transform_3, window_bounds = array<i64: 1, 4, 32, 32>}, {transform_indices = @transform_4, window_bounds = array<i64: 1, 32, 32>}, {transform_indices = @transform_5, window_bounds = array<i64: 1, 4, 32, 32>}, {transform_indices = @transform_6, window_bounds = array<i64: 1, 4, 32, 32>}, {pipeline_mode = #tpu.pipeline_mode<synchronous>, transform_indices = @transform_7, window_bounds = array<i64: 64, 64>}, {pipeline_mode = #tpu.pipeline_mode<synchronous>, transform_indices = @transform_8, window_bounds = array<i64: 64, 64>}, {transform_indices = @transform_9, window_bounds = array<i64: 1, 32, 32>}, {transform_indices = @transform_10, window_bounds = array<i64: 1, 32, 32>}]} {
    %c0 = arith.constant 0 : index
    %c0_0 = arith.constant 0 : index
    %c0_1 = arith.constant 0 : index
    %0 = vector.load %arg2[%c0, %c0_0, %c0_1] : memref<1x32x32xf32, #tpu.memory_space<vmem>>, vector<1x32x32xf32>
    %1 = vector.shape_cast %0 : vector<1x32x32xf32> to vector<32x32xf32>
    %c0_2 = arith.constant 0 : index
    %c0_3 = arith.constant 0 : index
    %c0_4 = arith.constant 0 : index
    %2 = vector.load %arg3[%c0_2, %c0_3, %c0_4] : memref<1x32x32xf32, #tpu.memory_space<vmem>>, vector<1x32x32xf32>
    %3 = vector.shape_cast %2 : vector<1x32x32xf32> to vector<32x32xf32>
    %c0_5 = arith.constant 0 : index
    %c0_6 = arith.constant 0 : index
    %c0_7 = arith.constant 0 : index
    %c0_8 = arith.constant 0 : index
    %4 = vector.load %arg4[%c0_5, %c0_6, %c0_7, %c0_8] : memref<1x4x32x32xf32, #tpu.memory_space<vmem>>, vector<1x4x32x32xf32>
    %5 = vector.shape_cast %4 : vector<1x4x32x32xf32> to vector<4x32x32xf32>
    %c0_9 = arith.constant 0 : index
    %c0_10 = arith.constant 0 : index
    %c0_11 = arith.constant 0 : index
    %c0_12 = arith.constant 0 : index
    %6 = vector.load %arg5[%c0_9, %c0_10, %c0_11, %c0_12] : memref<1x4x32x32xf32, #tpu.memory_space<vmem>>, vector<1x4x32x32xf32>
    %7 = vector.shape_cast %6 : vector<1x4x32x32xf32> to vector<4x32x32xf32>
    %c0_13 = arith.constant 0 : index
    %c0_14 = arith.constant 0 : index
    %8 = vector.load %arg9[%c0_13, %c0_14] : memref<64x64xbf16, #tpu.memory_space<vmem>>, vector<64x64xbf16>
    %c0_15 = arith.constant 0 : index
    %c0_16 = arith.constant 0 : index
    %9 = vector.load %arg10[%c0_15, %c0_16] : memref<64x64xbf16, #tpu.memory_space<vmem>>, vector<64x64xbf16>
    %10 = vector.shape_cast %1 : vector<32x32xf32> to vector<1x32x32xf32>
    %11 = vector.broadcast %10 : vector<1x32x32xf32> to vector<4x32x32xf32>
    %12 = arith.mulf %5, %11 : vector<4x32x32xf32>
    %13 = vector.shape_cast %3 : vector<32x32xf32> to vector<1x32x32xf32>
    %14 = vector.broadcast %13 : vector<1x32x32xf32> to vector<4x32x32xf32>
    %15 = arith.mulf %7, %14 : vector<4x32x32xf32>
    %16 = arith.subf %12, %15 : vector<4x32x32xf32>
    %17 = vector.shape_cast %3 : vector<32x32xf32> to vector<1x32x32xf32>
    %18 = vector.broadcast %17 : vector<1x32x32xf32> to vector<4x32x32xf32>
    %19 = arith.mulf %5, %18 : vector<4x32x32xf32>
    %20 = vector.shape_cast %1 : vector<32x32xf32> to vector<1x32x32xf32>
    %21 = vector.broadcast %20 : vector<1x32x32xf32> to vector<4x32x32xf32>
    %22 = arith.mulf %7, %21 : vector<4x32x32xf32>
    %23 = arith.addf %19, %22 : vector<4x32x32xf32>
    %24 = tpu.concatenate %16, %23 in 2 : vector<4x32x32xf32>, vector<4x32x32xf32> -> vector<4x32x64xf32>
    %25 = vector.shape_cast %24 : vector<4x32x64xf32> to vector<128x64xf32>
    %26 = arith.truncf %25 : vector<128x64xf32> to vector<128x64xbf16>
    %cst = arith.constant dense<0.000000e+00> : vector<128x64xf32>
    %27 = tpu.matmul %26, %8, %cst {dimension_numbers = #tpu.dot_dimension_numbers<[1], [0], [0], [1], [0, 0, 1, 1], [], []>} : vector<128x64xbf16>, vector<64x64xbf16>, vector<128x64xf32> -> vector<128x64xf32>
    %28 = vector.shape_cast %27 : vector<128x64xf32> to vector<4x32x64xf32>
    %29 = vector.extract_strided_slice %28 {offsets = [0, 0, 0], sizes = [4, 32, 32], strides = [1, 1, 1]} : vector<4x32x64xf32> to vector<4x32x32xf32>
    %30 = vector.extract_strided_slice %28 {offsets = [0, 0, 32], sizes = [4, 32, 32], strides = [1, 1, 1]} : vector<4x32x64xf32> to vector<4x32x32xf32>
    %31 = tpu.transpose %29, [0, 2, 1] : vector<4x32x32xf32> -> vector<4x32x32xf32>
    %32 = tpu.transpose %30, [0, 2, 1] : vector<4x32x32xf32> -> vector<4x32x32xf32>
    %33 = tpu.concatenate %31, %32 in 2 : vector<4x32x32xf32>, vector<4x32x32xf32> -> vector<4x32x64xf32>
    %34 = vector.shape_cast %33 : vector<4x32x64xf32> to vector<128x64xf32>
    %35 = arith.truncf %34 : vector<128x64xf32> to vector<128x64xbf16>
    %cst_17 = arith.constant dense<0.000000e+00> : vector<128x64xf32>
    %36 = tpu.matmul %35, %8, %cst_17 {dimension_numbers = #tpu.dot_dimension_numbers<[1], [0], [0], [1], [0, 0, 1, 1], [], []>} : vector<128x64xbf16>, vector<64x64xbf16>, vector<128x64xf32> -> vector<128x64xf32>
    %37 = vector.shape_cast %36 : vector<128x64xf32> to vector<4x32x64xf32>
    %38 = vector.extract_strided_slice %37 {offsets = [0, 0, 0], sizes = [4, 32, 32], strides = [1, 1, 1]} : vector<4x32x64xf32> to vector<4x32x32xf32>
    %39 = vector.extract_strided_slice %37 {offsets = [0, 0, 32], sizes = [4, 32, 32], strides = [1, 1, 1]} : vector<4x32x64xf32> to vector<4x32x32xf32>
    %c0_18 = arith.constant 0 : index
    %c0_19 = arith.constant 0 : index
    %c0_20 = arith.constant 0 : index
    %40 = vector.load %arg6[%c0_18, %c0_19, %c0_20] : memref<1x32x32xf32, #tpu.memory_space<vmem>>, vector<1x32x32xf32>
    %41 = vector.shape_cast %40 : vector<1x32x32xf32> to vector<32x32xf32>
    %42 = vector.shape_cast %41 : vector<32x32xf32> to vector<1x32x32xf32>
    %43 = vector.broadcast %42 : vector<1x32x32xf32> to vector<4x32x32xf32>
    %44 = arith.mulf %43, %38 : vector<4x32x32xf32>
    %c0_21 = arith.constant 0 : index
    %c0_22 = arith.constant 0 : index
    %c0_23 = arith.constant 0 : index
    %c0_24 = arith.constant 0 : index
    %45 = vector.load %arg7[%c0_21, %c0_22, %c0_23, %c0_24] : memref<1x4x32x32xf32, #tpu.memory_space<vmem>>, vector<1x4x32x32xf32>
    %46 = vector.shape_cast %45 : vector<1x4x32x32xf32> to vector<4x32x32xf32>
    %47 = arith.subf %44, %46 : vector<4x32x32xf32>
    %48 = vector.shape_cast %41 : vector<32x32xf32> to vector<1x32x32xf32>
    %49 = vector.broadcast %48 : vector<1x32x32xf32> to vector<4x32x32xf32>
    %50 = arith.mulf %49, %39 : vector<4x32x32xf32>
    %c0_25 = arith.constant 0 : index
    %c0_26 = arith.constant 0 : index
    %c0_27 = arith.constant 0 : index
    %c0_28 = arith.constant 0 : index
    %51 = vector.load %arg8[%c0_25, %c0_26, %c0_27, %c0_28] : memref<1x4x32x32xf32, #tpu.memory_space<vmem>>, vector<1x4x32x32xf32>
    %52 = vector.shape_cast %51 : vector<1x4x32x32xf32> to vector<4x32x32xf32>
    %53 = arith.subf %50, %52 : vector<4x32x32xf32>
    %54 = tpu.concatenate %47, %53 in 2 : vector<4x32x32xf32>, vector<4x32x32xf32> -> vector<4x32x64xf32>
    %55 = vector.shape_cast %54 : vector<4x32x64xf32> to vector<128x64xf32>
    %56 = arith.truncf %55 : vector<128x64xf32> to vector<128x64xbf16>
    %cst_29 = arith.constant dense<0.000000e+00> : vector<128x64xf32>
    %57 = tpu.matmul %56, %9, %cst_29 {dimension_numbers = #tpu.dot_dimension_numbers<[1], [0], [0], [1], [0, 0, 1, 1], [], []>} : vector<128x64xbf16>, vector<64x64xbf16>, vector<128x64xf32> -> vector<128x64xf32>
    %58 = vector.shape_cast %57 : vector<128x64xf32> to vector<4x32x64xf32>
    %59 = vector.extract_strided_slice %58 {offsets = [0, 0, 0], sizes = [4, 32, 32], strides = [1, 1, 1]} : vector<4x32x64xf32> to vector<4x32x32xf32>
    %60 = vector.extract_strided_slice %58 {offsets = [0, 0, 32], sizes = [4, 32, 32], strides = [1, 1, 1]} : vector<4x32x64xf32> to vector<4x32x32xf32>
    %61 = tpu.transpose %59, [0, 2, 1] : vector<4x32x32xf32> -> vector<4x32x32xf32>
    %62 = tpu.transpose %60, [0, 2, 1] : vector<4x32x32xf32> -> vector<4x32x32xf32>
    %63 = tpu.concatenate %61, %62 in 2 : vector<4x32x32xf32>, vector<4x32x32xf32> -> vector<4x32x64xf32>
    %64 = vector.shape_cast %63 : vector<4x32x64xf32> to vector<128x64xf32>
    %65 = arith.truncf %64 : vector<128x64xf32> to vector<128x64xbf16>
    %cst_30 = arith.constant dense<0.000000e+00> : vector<128x64xf32>
    %66 = tpu.matmul %65, %9, %cst_30 {dimension_numbers = #tpu.dot_dimension_numbers<[1], [0], [0], [1], [0, 0, 1, 1], [], []>} : vector<128x64xbf16>, vector<64x64xbf16>, vector<128x64xf32> -> vector<128x64xf32>
    %67 = vector.shape_cast %66 : vector<128x64xf32> to vector<4x32x64xf32>
    %68 = vector.extract_strided_slice %67 {offsets = [0, 0, 0], sizes = [4, 32, 32], strides = [1, 1, 1]} : vector<4x32x64xf32> to vector<4x32x32xf32>
    %69 = vector.extract_strided_slice %67 {offsets = [0, 0, 32], sizes = [4, 32, 32], strides = [1, 1, 1]} : vector<4x32x64xf32> to vector<4x32x32xf32>
    %70 = arith.mulf %5, %68 : vector<4x32x32xf32>
    %71 = arith.mulf %7, %69 : vector<4x32x32xf32>
    %72 = arith.addf %70, %71 : vector<4x32x32xf32>
    %cst_31 = arith.constant dense<0.000000e+00> : vector<32x32xf32>
    %73 = vector.multi_reduction <add>, %72, %cst_31 [0] : vector<4x32x32xf32> to vector<32x32xf32>
    %74 = arith.mulf %5, %69 : vector<4x32x32xf32>
    %75 = arith.mulf %7, %68 : vector<4x32x32xf32>
    %76 = arith.subf %74, %75 : vector<4x32x32xf32>
    %cst_32 = arith.constant dense<0.000000e+00> : vector<32x32xf32>
    %77 = vector.multi_reduction <add>, %76, %cst_32 [0] : vector<4x32x32xf32> to vector<32x32xf32>
    %c0_i32 = arith.constant 0 : i32
    %78 = arith.cmpi eq, %arg1, %c0_i32 : i32
    %79 = arith.extui %78 : i1 to i32
    %c0_i32_33 = arith.constant 0 : i32
    %80 = arith.cmpi ne, %79, %c0_i32_33 : i32
    scf.if %80 {
      %cst_36 = arith.constant 5.000000e-01 : f32
      %84 = vector.broadcast %cst_36 : f32 to vector<32x32xf32>
      %85 = arith.mulf %84, %73 : vector<32x32xf32>
      %86 = arith.subf %1, %85 : vector<32x32xf32>
      %c0_37 = arith.constant 0 : index
      %c0_38 = arith.constant 0 : index
      %c0_39 = arith.constant 0 : index
      %87 = vector.load %arg11[%c0_37, %c0_38, %c0_39] : memref<1x32x32xf32, #tpu.memory_space<vmem>>, vector<1x32x32xf32>
      %88 = vector.shape_cast %87 : vector<1x32x32xf32> to vector<32x32xf32>
      %89 = vector.shape_cast %86 : vector<32x32xf32> to vector<1x32x32xf32>
      tpu.vector_store %arg11[%c0_37, %c0_38, %c0_39], %89 {strides = array<i32>} : memref<1x32x32xf32, #tpu.memory_space<vmem>>, vector<1x32x32xf32>,
      %cst_40 = arith.constant 5.000000e-01 : f32
      %90 = vector.broadcast %cst_40 : f32 to vector<32x32xf32>
      %91 = arith.mulf %90, %77 : vector<32x32xf32>
      %92 = arith.subf %3, %91 : vector<32x32xf32>
      %c0_41 = arith.constant 0 : index
      %c0_42 = arith.constant 0 : index
      %c0_43 = arith.constant 0 : index
      %93 = vector.load %arg12[%c0_41, %c0_42, %c0_43] : memref<1x32x32xf32, #tpu.memory_space<vmem>>, vector<1x32x32xf32>
      %94 = vector.shape_cast %93 : vector<1x32x32xf32> to vector<32x32xf32>
      %95 = vector.shape_cast %92 : vector<32x32xf32> to vector<1x32x32xf32>
      tpu.vector_store %arg12[%c0_41, %c0_42, %c0_43], %95 {strides = array<i32>} : memref<1x32x32xf32, #tpu.memory_space<vmem>>, vector<1x32x32xf32>,
    } else {
    }
    %c0_i32_34 = arith.constant 0 : i32
    %81 = arith.cmpi sgt, %arg1, %c0_i32_34 : i32
    %82 = arith.extui %81 : i1 to i32
    %c0_i32_35 = arith.constant 0 : i32
    %83 = arith.cmpi ne, %82, %c0_i32_35 : i32
    scf.if %83 {
      %c0_36 = arith.constant 0 : index
      %c0_37 = arith.constant 0 : index
      %c0_38 = arith.constant 0 : index
      %84 = vector.load %arg11[%c0_36, %c0_37, %c0_38] : memref<1x32x32xf32, #tpu.memory_space<vmem>>, vector<1x32x32xf32>
      %85 = vector.shape_cast %84 : vector<1x32x32xf32> to vector<32x32xf32>
      %cst_39 = arith.constant 5.000000e-01 : f32
      %86 = vector.broadcast %cst_39 : f32 to vector<32x32xf32>
      %87 = arith.mulf %86, %73 : vector<32x32xf32>
      %88 = arith.subf %85, %87 : vector<32x32xf32>
      %c0_40 = arith.constant 0 : index
      %c0_41 = arith.constant 0 : index
      %c0_42 = arith.constant 0 : index
      %89 = vector.load %arg11[%c0_40, %c0_41, %c0_42] : memref<1x32x32xf32, #tpu.memory_space<vmem>>, vector<1x32x32xf32>
      %90 = vector.shape_cast %89 : vector<1x32x32xf32> to vector<32x32xf32>
      %91 = vector.shape_cast %88 : vector<32x32xf32> to vector<1x32x32xf32>
      tpu.vector_store %arg11[%c0_40, %c0_41, %c0_42], %91 {strides = array<i32>} : memref<1x32x32xf32, #tpu.memory_space<vmem>>, vector<1x32x32xf32>,
      %c0_43 = arith.constant 0 : index
      %c0_44 = arith.constant 0 : index
      %c0_45 = arith.constant 0 : index
      %92 = vector.load %arg12[%c0_43, %c0_44, %c0_45] : memref<1x32x32xf32, #tpu.memory_space<vmem>>, vector<1x32x32xf32>
      %93 = vector.shape_cast %92 : vector<1x32x32xf32> to vector<32x32xf32>
      %cst_46 = arith.constant 5.000000e-01 : f32
      %94 = vector.broadcast %cst_46 : f32 to vector<32x32xf32>
      %95 = arith.mulf %94, %77 : vector<32x32xf32>
      %96 = arith.subf %93, %95 : vector<32x32xf32>
      %c0_47 = arith.constant 0 : index
      %c0_48 = arith.constant 0 : index
      %c0_49 = arith.constant 0 : index
      %97 = vector.load %arg12[%c0_47, %c0_48, %c0_49] : memref<1x32x32xf32, #tpu.memory_space<vmem>>, vector<1x32x32xf32>
      %98 = vector.shape_cast %97 : vector<1x32x32xf32> to vector<32x32xf32>
      %99 = vector.shape_cast %96 : vector<32x32xf32> to vector<1x32x32xf32>
      tpu.vector_store %arg12[%c0_47, %c0_48, %c0_49], %99 {strides = array<i32>} : memref<1x32x32xf32, #tpu.memory_space<vmem>>, vector<1x32x32xf32>,
    } else {
    }
    return
  }
  func.func @transform_0(%arg0: i32, %arg1: i32) -> (i32, i32, i32) {
    %c0_i32 = arith.constant 0 : i32
    %c0_i32_0 = arith.constant 0 : i32
    %c0_i32_1 = arith.constant 0 : i32
    return %arg0, %c0_i32, %c0_i32_0 : i32, i32, i32
  }
  func.func @transform_1(%arg0: i32, %arg1: i32) -> (i32, i32, i32) {
    %c0_i32 = arith.constant 0 : i32
    %c0_i32_0 = arith.constant 0 : i32
    %c0_i32_1 = arith.constant 0 : i32
    return %arg0, %c0_i32, %c0_i32_0 : i32, i32, i32
  }
  func.func @transform_2(%arg0: i32, %arg1: i32) -> (i32, i32, i32, i32) {
    %c0_i32 = arith.constant 0 : i32
    %c0_i32_0 = arith.constant 0 : i32
    %c0_i32_1 = arith.constant 0 : i32
    return %arg0, %arg1, %c0_i32, %c0_i32_0 : i32, i32, i32, i32
  }
  func.func @transform_3(%arg0: i32, %arg1: i32) -> (i32, i32, i32, i32) {
    %c0_i32 = arith.constant 0 : i32
    %c0_i32_0 = arith.constant 0 : i32
    %c0_i32_1 = arith.constant 0 : i32
    return %arg0, %arg1, %c0_i32, %c0_i32_0 : i32, i32, i32, i32
  }
  func.func @transform_4(%arg0: i32, %arg1: i32) -> (i32, i32, i32) {
    %c0_i32 = arith.constant 0 : i32
    %c0_i32_0 = arith.constant 0 : i32
    %c0_i32_1 = arith.constant 0 : i32
    return %arg0, %c0_i32, %c0_i32_0 : i32, i32, i32
  }
  func.func @transform_5(%arg0: i32, %arg1: i32) -> (i32, i32, i32, i32) {
    %c0_i32 = arith.constant 0 : i32
    %c0_i32_0 = arith.constant 0 : i32
    %c0_i32_1 = arith.constant 0 : i32
    return %arg0, %arg1, %c0_i32, %c0_i32_0 : i32, i32, i32, i32
  }
  func.func @transform_6(%arg0: i32, %arg1: i32) -> (i32, i32, i32, i32) {
    %c0_i32 = arith.constant 0 : i32
    %c0_i32_0 = arith.constant 0 : i32
    %c0_i32_1 = arith.constant 0 : i32
    return %arg0, %arg1, %c0_i32, %c0_i32_0 : i32, i32, i32, i32
  }
  func.func @transform_7(%arg0: i32, %arg1: i32) -> (i32, i32) {
    %c0_i32 = arith.constant 0 : i32
    %c0_i32_0 = arith.constant 0 : i32
    %c0_i32_1 = arith.constant 0 : i32
    return %c0_i32, %c0_i32_0 : i32, i32
  }
  func.func @transform_8(%arg0: i32, %arg1: i32) -> (i32, i32) {
    %c0_i32 = arith.constant 0 : i32
    %c0_i32_0 = arith.constant 0 : i32
    %c0_i32_1 = arith.constant 0 : i32
    return %c0_i32, %c0_i32_0 : i32, i32
  }
  func.func @transform_9(%arg0: i32, %arg1: i32) -> (i32, i32, i32) {
    %c0_i32 = arith.constant 0 : i32
    %c0_i32_0 = arith.constant 0 : i32
    %c0_i32_1 = arith.constant 0 : i32
    return %arg0, %c0_i32, %c0_i32_0 : i32, i32, i32
  }
  func.func @transform_10(%arg0: i32, %arg1: i32) -> (i32, i32, i32) {
    %c0_i32 = arith.constant 0 : i32
    %c0_i32_0 = arith.constant 0 : i32
    %c0_i32_1 = arith.constant 0 : i32
    return %arg0, %c0_i32, %c0_i32_0 : i32, i32, i32
  }
}

</mosaic_0001>

<llo_original>
// kernel: tpu_custom_call.1
$region0: #{tpu_custom_call.1}
  #allocation0 [shape = 'u32[]', space=smem, size = 0x4, offset = 0x4, fixed_abs, tag = 'smem constant byte address 0x4 - core index']
  #allocation1 [shape = 'u32[144,128]{1,0:T(1,128)}', space=vmem, size = 0x12000, scoped, tag = 'internal scratch']
  %s0 = inlined_call_operand.hbm [shape: f32[2,32,32], index: 0, kind: input, shape index: {}]
  %s1 = inlined_call_operand.hbm [shape: f32[2,32,32], index: 1, kind: input, shape index: {}]
  %s2 = inlined_call_operand.hbm [shape: f32[2,4,32,32], index: 2, kind: input, shape index: {}]
  %s3 = inlined_call_operand.hbm [shape: f32[2,4,32,32], index: 3, kind: input, shape index: {}]
  %s4 = inlined_call_operand.hbm [shape: f32[2,32,32], index: 4, kind: input, shape index: {}]
  %s5 = inlined_call_operand.hbm [shape: f32[2,4,32,32], index: 5, kind: input, shape index: {}]
  %s6 = inlined_call_operand.hbm [shape: f32[2,4,32,32], index: 6, kind: input, shape index: {}]
  %s7 = inlined_call_operand.hbm [shape: bf16[64,64], index: 7, kind: input, shape index: {}]
  %s8 = inlined_call_operand.hbm [shape: bf16[64,64], index: 8, kind: input, shape index: {}]
  %s9 = inlined_call_operand.hbm [shape: f32[2,32,32], index: 9, kind: output, shape index: {0}]
  %s10 = inlined_call_operand.hbm [shape: f32[2,32,32], index: 10, kind: output, shape index: {1}]
  %11 = xla_tuple %s9, %s10
  %s12 = sld [smem:[#allocation0]]
  $region121: #{tpu_custom_call.1} parent=0
    _
  %s14 = ssub.s32 1, %s12
  %s15 = scalar_select 0, %s14, %s12
  $region1: #{tpu_custom_call.1} parent=0
    #allocation2 [shape = 'u8[32768]{0}', space=vmem, size = 0x8000, scoped, tag = 'input window, operand 0']
    #allocation3 [shape = 's32[2]{0}', space=sflag, size = 0x8, scoped, tag = 'scoped memory for tpu_custom_call.1']
    #allocation4 [shape = 's32[2]{0}', space=sflag, size = 0x8, scoped, tag = 'scoped memory for tpu_custom_call.1']
    #allocation5 [shape = 'u8[32768]{0}', space=vmem, size = 0x8000, scoped, tag = 'input window, operand 1']
    #allocation6 [shape = 's32[2]{0}', space=sflag, size = 0x8, scoped, tag = 'scoped memory for tpu_custom_call.1']
    #allocation7 [shape = 'u8[131072]{0}', space=vmem, size = 0x20000, scoped, tag = 'input window, operand 2']
    #allocation8 [shape = 'u8[131072]{0}', space=vmem, size = 0x20000, scoped, tag = 'input window, operand 3']
    #allocation9 [shape = 's32[2]{0}', space=sflag, size = 0x8, scoped, tag = 'scoped memory for tpu_custom_call.1']
    #allocation10 [shape = 'u8[32768]{0}', space=vmem, size = 0x8000, scoped, tag = 'input window, operand 4']
    #allocation11 [shape = 'u8[131072]{0}', space=vmem, size = 0x20000, scoped, tag = 'input window, operand 5']
    #allocation12 [shape = 's32[2]{0}', space=sflag, size = 0x8, scoped, tag = 'scoped memory for tpu_custom_call.1']
    #allocation13 [shape = 'u8[131072]{0}', space=vmem, size = 0x20000, scoped, tag = 'input window, operand 6']
    #allocation14 [shape = 'u8[16384]{0}', space=vmem, size = 0x4000, scoped, tag = 'input window, operand 7, single buffered']
    #allocation15 [shape = 's32[1]{0}', space=sflag, size = 0x4, scoped, tag = 'scoped memory for tpu_custom_call.1']
    #allocation16 [shape = 'u8[16384]{0}', space=vmem, size = 0x4000, scoped, tag = 'input window, operand 8, single buffered']
    #allocation17 [shape = 'u8[32768]{0}', space=vmem, size = 0x8000, scoped, tag = 'output window, operand 0']
    #allocation18 [shape = 'u8[32768]{0}', space=vmem, size = 0x8000, scoped, tag = 'output window, operand 1']
    #allocation19 [shape = 's32[2]{0}', space=sflag, size = 0x8, scoped, tag = 'scoped memory for tpu_custom_call.1']
    %16 = vsyncpa [#allocation3], 0
    %s17 = scalar_lea.sflag [#allocation3], 1
    %18 = vsyncpa %s17, 0
    %19 = vsyncpa [#allocation6], 0
    %s20 = scalar_lea.sflag [#allocation6], 1
    %21 = vsyncpa %s20, 0
    %22 = vsyncpa [#allocation9], 0
    %s23 = scalar_lea.sflag [#allocation9], 1
    %24 = vsyncpa %s23, 0
    %25 = vsyncpa [#allocation12], 0
    %s26 = scalar_lea.sflag [#allocation12], 1
    %27 = vsyncpa %s26, 0
    %28 = vsyncpa [#allocation15], 0
    %29 = vsyncpa [#allocation4], 0
    %s30 = scalar_lea.sflag [#allocation4], 1
    %31 = vsyncpa %s30, 0
    %32 = vsyncpa [#allocation19], 0
    %s33 = scalar_lea.sflag [#allocation19], 1
    %34 = vsyncpa %s33, 0
    loop: start=0, step=1, limit=4
    $region2: #{tpu_custom_call.1} parent=1 // loop_pre_header
      _
    $region3: #{tpu_custom_call.1} parent=1 // loop_header
      %s36 = sphi 0, %s40
      %p37 = scmp.ge.s32.totalorder %s36, 4
      %s43 = sphi 0, %s55
      %s44 = sphi 0, %s51
      %s45 = sphi 0, %s43
      %s46 = sphi 0, %s44
      %s47 = sphi 0, %s45
      %s48 = sphi 0, %s46
      %s58 = sphi 0, %s60
      %s61 = sphi 0, %s58
      %s62 = sphi 0, %s61
      %s78 = sphi 0, %s62
      %s84 = sphi 0, %s86
      %s87 = sphi 0, %s84
      %s88 = sphi 0, %s87
      %s104 = sphi 0, %s88
      %s112 = sphi 0, %s114
      %s115 = sphi 0, %s112
      %s116 = sphi 0, %s115
      %s132 = sphi 0, %s116
      %s140 = sphi 0, %s142
      %s143 = sphi 0, %s140
      %s144 = sphi 0, %s143
      %s160 = sphi 0, %s144
      %s166 = sphi 0, %s168
      %s169 = sphi 0, %s166
      %s170 = sphi 0, %s169
      %s186 = sphi 0, %s170
      %s194 = sphi 0, %s196
      %s197 = sphi 0, %s194
      %s198 = sphi 0, %s197
      %s214 = sphi 0, %s198
      %s222 = sphi 0, %s224
      %s225 = sphi 0, %s222
      %s226 = sphi 0, %s225
      %s242 = sphi 0, %s226
      %s246 = sphi 0, %s246
      %s248 = sphi 0, %s246
      %s249 = sphi 0, %s248
      %s263 = sphi 0, %s249
      %s267 = sphi 0, %s267
      %s269 = sphi 0, %s267
      %s270 = sphi 0, %s269
      %s284 = sphi 0, %s270
      %s290 = sphi 0, %s292
      %s293 = sphi 0, %s290
      %s294 = sphi 0, %s293
      %s310 = sphi 0, %s294
      %s316 = sphi 0, %s318
      %s319 = sphi 0, %s316
      %s320 = sphi 0, %s319
      %s336 = sphi 0, %s320
    $region4: #{tpu_custom_call.1} parent=1 // loop_header_branch
      %39 = sbr.rel (%p37) target = $region8
    $region5: #{tpu_custom_call.1} parent=1 // loop_body
      %s41 = ssub.s32 %s36, 1
      %s42 = ssub.s32 %s36, 2
      %s49 = sadd.s32 1, %s44
      %p50 = scmp.ge.s32.totalorder %s49, 1
      %s51 = scalar_select %p50, 0, %s49
      %s52 = sadd.s32 1, %s43
      %s53 = scalar_select %p50, %s52, %s43
      %p54 = scmp.ge.s32.totalorder %s53, 2
      %s55 = scalar_select %p54, 0, %s53
      %s56 = ssub.s32 %s43, %s55
      %p57 = scmp.eq.s32.totalorder %s56, 0
      %s59 = sadd.s32 %s58, 1
      %s60 = scalar_select %p57, %s58, %s59
      %p63 = pneg %p57
      %p64 = scmp.eq.s32.totalorder %s36, 1
      %p65 = por %p63, %p64
      %p66 = scmp.ne.s32.totalorder %s58, %s61
      %p67 = scmp.eq.s32.totalorder %s36, 0
      %p68 = por %p66, %p67
      %p69 = scmp.ne.s32.totalorder %s58, %s61
      %p70 = scmp.eq.s32.totalorder %s41, 1
      %p71 = por %p69, %p70
      %p72 = scmp.ne.s32.totalorder %s61, %s62
      %p73 = scmp.eq.s32.totalorder %s41, 0
      %p74 = por %p72, %p73
      %p75 = scmp.ne.s32.totalorder %s61, %s62
      %p76 = scmp.eq.s32.totalorder %s42, 1
      %p77 = por %p75, %p76
      %p79 = scmp.ne.s32.totalorder %s62, %s78
      %p80 = scmp.eq.s32.totalorder %s42, 0
      %p81 = por %p79, %p80
      %s82 = ssub.s32 %s43, %s55
      %p83 = scmp.eq.s32.totalorder %s82, 0
      %s85 = sadd.s32 %s84, 1
      %s86 = scalar_select %p83, %s84, %s85
      %p89 = pneg %p83
      %p90 = scmp.eq.s32.totalorder %s36, 1
      %p91 = por %p89, %p90
      %p92 = scmp.ne.s32.totalorder %s84, %s87
      %p93 = scmp.eq.s32.totalorder %s36, 0
      %p94 = por %p92, %p93
      %p95 = scmp.ne.s32.totalorder %s84, %s87
      %p96 = scmp.eq.s32.totalorder %s41, 1
      %p97 = por %p95, %p96
      %p98 = scmp.ne.s32.totalorder %s87, %s88
      %p99 = scmp.eq.s32.totalorder %s41, 0
      %p100 = por %p98, %p99
      %p101 = scmp.ne.s32.totalorder %s87, %s88
      %p102 = scmp.eq.s32.totalorder %s42, 1
      %p103 = por %p101, %p102
      %p105 = scmp.ne.s32.totalorder %s88, %s104
      %p106 = scmp.eq.s32.totalorder %s42, 0
      %p107 = por %p105, %p106
      %s108 = ssub.s32 %s43, %s55
      %s109 = ssub.s32 %s44, %s51
      %s110 = sor.u32 %s108, %s109
      %p111 = scmp.eq.s32.totalorder %s110, 0
      %s113 = sadd.s32 %s112, 1
      %s114 = scalar_select %p111, %s112, %s113
      %p117 = pneg %p111
      %p118 = scmp.eq.s32.totalorder %s36, 1
      %p119 = por %p117, %p118
      %p120 = scmp.ne.s32.totalorder %s112, %s115
      %p121 = scmp.eq.s32.totalorder %s36, 0
      %p122 = por %p120, %p121
      %p123 = scmp.ne.s32.totalorder %s112, %s115
      %p124 = scmp.eq.s32.totalorder %s41, 1
      %p125 = por %p123, %p124
      %p126 = scmp.ne.s32.totalorder %s115, %s116
      %p127 = scmp.eq.s32.totalorder %s41, 0
      %p128 = por %p126, %p127
      %p129 = scmp.ne.s32.totalorder %s115, %s116
      %p130 = scmp.eq.s32.totalorder %s42, 1
      %p131 = por %p129, %p130
      %p133 = scmp.ne.s32.totalorder %s116, %s132
      %p134 = scmp.eq.s32.totalorder %s42, 0
      %p135 = por %p133, %p134
      %s136 = ssub.s32 %s43, %s55
      %s137 = ssub.s32 %s44, %s51
      %s138 = sor.u32 %s136, %s137
      %p139 = scmp.eq.s32.totalorder %s138, 0
      %s141 = sadd.s32 %s140, 1
      %s142 = scalar_select %p139, %s140, %s141
      %p145 = pneg %p139
      %p146 = scmp.eq.s32.totalorder %s36, 1
      %p147 = por %p145, %p146
      %p148 = scmp.ne.s32.totalorder %s140, %s143
      %p149 = scmp.eq.s32.totalorder %s36, 0
      %p150 = por %p148, %p149
      %p151 = scmp.ne.s32.totalorder %s140, %s143
      %p152 = scmp.eq.s32.totalorder %s41, 1
      %p153 = por %p151, %p152
      %p154 = scmp.ne.s32.totalorder %s143, %s144
      %p155 = scmp.eq.s32.totalorder %s41, 0
      %p156 = por %p154, %p155
      %p157 = scmp.ne.s32.totalorder %s143, %s144
      %p158 = scmp.eq.s32.totalorder %s42, 1
      %p159 = por %p157, %p158
      %p161 = scmp.ne.s32.totalorder %s144, %s160
      %p162 = scmp.eq.s32.totalorder %s42, 0
      %p163 = por %p161, %p162
      %s164 = ssub.s32 %s43, %s55
      %p165 = scmp.eq.s32.totalorder %s164, 0
      %s167 = sadd.s32 %s166, 1
      %s168 = scalar_select %p165, %s166, %s167
      %p171 = pneg %p165
      %p172 = scmp.eq.s32.totalorder %s36, 1
      %p173 = por %p171, %p172
      %p174 = scmp.ne.s32.totalorder %s166, %s169
      %p175 = scmp.eq.s32.totalorder %s36, 0
      %p176 = por %p174, %p175
      %p177 = scmp.ne.s32.totalorder %s166, %s169
      %p178 = scmp.eq.s32.totalorder %s41, 1
      %p179 = por %p177, %p178
      %p180 = scmp.ne.s32.totalorder %s169, %s170
      %p181 = scmp.eq.s32.totalorder %s41, 0
      %p182 = por %p180, %p181
      %p183 = scmp.ne.s32.totalorder %s169, %s170
      %p184 = scmp.eq.s32.totalorder %s42, 1
      %p185 = por %p183, %p184
      %p187 = scmp.ne.s32.totalorder %s170, %s186
      %p188 = scmp.eq.s32.totalorder %s42, 0
      %p189 = por %p187, %p188
      %s190 = ssub.s32 %s43, %s55
      %s191 = ssub.s32 %s44, %s51
      %s192 = sor.u32 %s190, %s191
      %p193 = scmp.eq.s32.totalorder %s192, 0
      %s195 = sadd.s32 %s194, 1
      %s196 = scalar_select %p193, %s194, %s195
      %p199 = pneg %p193
      %p200 = scmp.eq.s32.totalorder %s36, 1
      %p201 = por %p199, %p200
      %p202 = scmp.ne.s32.totalorder %s194, %s197
      %p203 = scmp.eq.s32.totalorder %s36, 0
      %p204 = por %p202, %p203
      %p205 = scmp.ne.s32.totalorder %s194, %s197
      %p206 = scmp.eq.s32.totalorder %s41, 1
      %p207 = por %p205, %p206
      %p208 = scmp.ne.s32.totalorder %s197, %s198
      %p209 = scmp.eq.s32.totalorder %s41, 0
      %p210 = por %p208, %p209
      %p211 = scmp.ne.s32.totalorder %s197, %s198
      %p212 = scmp.eq.s32.totalorder %s42, 1
      %p213 = por %p211, %p212
      %p215 = scmp.ne.s32.totalorder %s198, %s214
      %p216 = scmp.eq.s32.totalorder %s42, 0
      %p217 = por %p215, %p216
      %s218 = ssub.s32 %s43, %s55
      %s219 = ssub.s32 %s44, %s51
      %s220 = sor.u32 %s218, %s219
      %p221 = scmp.eq.s32.totalorder %s220, 0
      %s223 = sadd.s32 %s222, 1
      %s224 = scalar_select %p221, %s222, %s223
      %p227 = pneg %p221
      %p228 = scmp.eq.s32.totalorder %s36, 1
      %p229 = por %p227, %p228
      %p230 = scmp.ne.s32.totalorder %s222, %s225
      %p231 = scmp.eq.s32.totalorder %s36, 0
      %p232 = por %p230, %p231
      %p233 = scmp.ne.s32.totalorder %s222, %s225
      %p234 = scmp.eq.s32.totalorder %s41, 1
      %p235 = por %p233, %p234
      %p236 = scmp.ne.s32.totalorder %s225, %s226
      %p237 = scmp.eq.s32.totalorder %s41, 0
      %p238 = por %p236, %p237
      %p239 = scmp.ne.s32.totalorder %s225, %s226
      %p240 = scmp.eq.s32.totalorder %s42, 1
      %p241 = por %p239, %p240
      %p243 = scmp.ne.s32.totalorder %s226, %s242
      %p244 = scmp.eq.s32.totalorder %s42, 0
      %p245 = por %p243, %p244
      %s247 = sadd.s32 %s246, 1
      %p250 = scmp.eq.s32.totalorder %s36, 1
      %p251 = scmp.ne.s32.totalorder %s246, %s248
      %p252 = scmp.eq.s32.totalorder %s36, 0
      %p253 = por %p251, %p252
      %p254 = scmp.ne.s32.totalorder %s246, %s248
      %p255 = scmp.eq.s32.totalorder %s41, 1
      %p256 = por %p254, %p255
      %p257 = scmp.ne.s32.totalorder %s248, %s249
      %p258 = scmp.eq.s32.totalorder %s41, 0
      %p259 = por %p257, %p258
      %p260 = scmp.ne.s32.totalorder %s248, %s249
      %p261 = scmp.eq.s32.totalorder %s42, 1
      %p262 = por %p260, %p261
      %p264 = scmp.ne.s32.totalorder %s249, %s263
      %p265 = scmp.eq.s32.totalorder %s42, 0
      %p266 = por %p264, %p265
      %s268 = sadd.s32 %s267, 1
      %p271 = scmp.eq.s32.totalorder %s36, 1
      %p272 = scmp.ne.s32.totalorder %s267, %s269
      %p273 = scmp.eq.s32.totalorder %s36, 0
      %p274 = por %p272, %p273
      %p275 = scmp.ne.s32.totalorder %s267, %s269
      %p276 = scmp.eq.s32.totalorder %s41, 1
      %p277 = por %p275, %p276
      %p278 = scmp.ne.s32.totalorder %s269, %s270
      %p279 = scmp.eq.s32.totalorder %s41, 0
      %p280 = por %p278, %p279
      %p281 = scmp.ne.s32.totalorder %s269, %s270
      %p282 = scmp.eq.s32.totalorder %s42, 1
      %p283 = por %p281, %p282
      %p285 = scmp.ne.s32.totalorder %s270, %s284
      %p286 = scmp.eq.s32.totalorder %s42, 0
      %p287 = por %p285, %p286
      %s288 = ssub.s32 %s43, %s55
      %p289 = scmp.eq.s32.totalorder %s288, 0
      %s291 = sadd.s32 %s290, 1
      %s292 = scalar_select %p289, %s290, %s291
      %p295 = pneg %p289
      %p296 = scmp.eq.s32.totalorder %s36, 1
      %p297 = por %p295, %p296
      %p298 = scmp.ne.s32.totalorder %s290, %s293
      %p299 = scmp.eq.s32.totalorder %s36, 0
      %p300 = por %p298, %p299
      %p301 = scmp.ne.s32.totalorder %s290, %s293
      %p302 = scmp.eq.s32.totalorder %s41, 1
      %p303 = por %p301, %p302
      %p304 = scmp.ne.s32.totalorder %s293, %s294
      %p305 = scmp.eq.s32.totalorder %s41, 0
      %p306 = por %p304, %p305
      %p307 = scmp.ne.s32.totalorder %s293, %s294
      %p308 = scmp.eq.s32.totalorder %s42, 1
      %p309 = por %p307, %p308
      %p311 = scmp.ne.s32.totalorder %s294, %s310
      %p312 = scmp.eq.s32.totalorder %s42, 0
      %p313 = por %p311, %p312
      %s314 = ssub.s32 %s43, %s55
      %p315 = scmp.eq.s32.totalorder %s314, 0
      %s317 = sadd.s32 %s316, 1
      %s318 = scalar_select %p315, %s316, %s317
      %p321 = pneg %p315
      %p322 = scmp.eq.s32.totalorder %s36, 1
      %p323 = por %p321, %p322
      %p324 = scmp.ne.s32.totalorder %s316, %s319
      %p325 = scmp.eq.s32.totalorder %s36, 0
      %p326 = por %p324, %p325
      %p327 = scmp.ne.s32.totalorder %s316, %s319
      %p328 = scmp.eq.s32.totalorder %s41, 1
      %p329 = por %p327, %p328
      %p330 = scmp.ne.s32.totalorder %s319, %s320
      %p331 = scmp.eq.s32.totalorder %s41, 0
      %p332 = por %p330, %p331
      %p333 = scmp.ne.s32.totalorder %s319, %s320
      %p334 = scmp.eq.s32.totalorder %s42, 1
      %p335 = por %p333, %p334
      %p337 = scmp.ne.s32.totalorder %s320, %s336
      %p338 = scmp.eq.s32.totalorder %s42, 0
      %p339 = por %p337, %p338
      %p340 = scmp.le.s32.totalorder 1, %s36
      %p341 = scmp.lt.s32.totalorder %s36, 3
      %p342 = pnand %p340, %p341
      %p343 = pneg %p342
      // Predicated region
      $region9: #{tpu_custom_call.1} parent=5 // pred_check
        _
      $region10: #{tpu_custom_call.1} parent=5 // pred_check_branch
        %345 = sbr.rel (%p342) target = $region12
      $region11: #{tpu_custom_call.1} parent=5 // pred_region
        %s346 = ssub.s32 %s36, 1
        // Predicated region
        $region13: #{tpu_custom_call.1} parent=11 // pred_check
          %p347 = pneg %p259
        $region14: #{tpu_custom_call.1} parent=11 // pred_check_branch
          %349 = sbr.rel (%p347) target = $region16
        $region15: #{tpu_custom_call.1} parent=11 // pred_region
          %s351 = ssub.s32 512, 512
          %352 = vsyncadd [#allocation15], %s351
          %s353 = sshll.u32 [#allocation14], 4
          %s354 = int_to_ptr.vmem [resolvable:$true] %s353
          %359 = dma.hbm_to_vmem [thread:$0]  %s7, 512, %s354, [#allocation15], 64, 64, 4
        $region16: #{tpu_custom_call.1} parent=11 // pred_fallthru
          _
        // Predicated region
        $region17: #{tpu_custom_call.1} parent=11 // pred_check
          %p360 = pneg %p280
        $region18: #{tpu_custom_call.1} parent=11 // pred_check_branch
          %362 = sbr.rel (%p360) target = $region20
        $region19: #{tpu_custom_call.1} parent=11 // pred_region
          %s364 = ssub.s32 512, 512
          %365 = vsyncadd [#allocation15], %s364
          %s366 = sshll.u32 [#allocation16], 4
          %s367 = int_to_ptr.vmem [resolvable:$true] %s366
          %372 = dma.hbm_to_vmem [thread:$0]  %s8, 512, %s367, [#allocation15], 64, 64, 4
        $region20: #{tpu_custom_call.1} parent=11 // pred_fallthru
          _
      $region12: #{tpu_custom_call.1} parent=5 // pred_fallthru
        _
      %p373 = scmp.lt.s32.totalorder %s36, 2
      // Predicated region
      $region21: #{tpu_custom_call.1} parent=5 // pred_check
        %p374 = pneg %p373
      $region22: #{tpu_custom_call.1} parent=5 // pred_check_branch
        %376 = sbr.rel (%p374) target = $region24
      $region23: #{tpu_custom_call.1} parent=5 // pred_region
        // Predicated region
        $region25: #{tpu_custom_call.1} parent=23 // pred_check
          %p377 = pneg %p68
        $region26: #{tpu_custom_call.1} parent=23 // pred_check_branch
          %379 = sbr.rel (%p377) target = $region28
        $region27: #{tpu_custom_call.1} parent=23 // pred_region
          %s380 = sand.u32 %s58, 1
          %s381 = scalar_lea.sflag [#allocation3], %s380
          %s382 = sand.u32 %s58, 1
          %s383 = smul.addr %s382, 32
          %s384 = scalar_lea.vmem [#allocation2], %s383
          %s386 = ssub.s32 512, 512
          %387 = vsyncadd %s381, %s386
          %s388 = smul.addr %s43, 4
          %s389 = smul.addr %s388, 128
          %s390 = scalar_lea.hbm %s0, %s389
          %s391 = sshll.u32 %s384, 4
          %s392 = int_to_ptr.vmem [resolvable:$true] %s391
          %397 = dma.hbm_to_vmem [thread:$0]  %s390, 512, %s392, %s381, 128, 128, 8
        $region28: #{tpu_custom_call.1} parent=23 // pred_fallthru
          _
        // Predicated region
        $region29: #{tpu_custom_call.1} parent=23 // pred_check
          %p398 = pneg %p94
        $region30: #{tpu_custom_call.1} parent=23 // pred_check_branch
          %400 = sbr.rel (%p398) target = $region32
        $region31: #{tpu_custom_call.1} parent=23 // pred_region
          %s401 = sand.u32 %s36, 1
          %s402 = scalar_lea.sflag [#allocation6], %s401
          %s403 = sand.u32 %s84, 1
          %s404 = smul.addr %s403, 32
          %s405 = scalar_lea.vmem [#allocation5], %s404
          %s407 = ssub.s32 512, 512
          %408 = vsyncadd %s402, %s407
          %s409 = smul.addr %s43, 4
          %s410 = smul.addr %s409, 128
          %s411 = scalar_lea.hbm %s1, %s410
          %s412 = sshll.u32 %s405, 4
          %s413 = int_to_ptr.vmem [resolvable:$true] %s412
          %418 = dma.hbm_to_vmem [thread:$0]  %s411, 512, %s413, %s402, 128, 128, 8
        $region32: #{tpu_custom_call.1} parent=23 // pred_fallthru
          _
        // Predicated region
        $region33: #{tpu_custom_call.1} parent=23 // pred_check
          %p419 = pneg %p122
        $region34: #{tpu_custom_call.1} parent=23 // pred_check_branch
          %421 = sbr.rel (%p419) target = $region36
        $region35: #{tpu_custom_call.1} parent=23 // pred_region
          %s422 = sand.u32 %s36, 1
          %s423 = scalar_lea.sflag [#allocation6], %s422
          %s424 = sand.u32 %s112, 1
          %s425 = smul.addr %s424, 128
          %s426 = scalar_lea.vmem [#allocation7], %s425
          %s427 = smul.u32 4, %s44
          %s429 = ssub.s32 2048, 2048
          %430 = vsyncadd %s423, %s429
          %s431 = smul.addr %s427, 4
          %s432 = smul.addr %s43, 16
          %s433 = sadd.s32 %s431, %s432
          %s434 = smul.addr %s433, 128
          %s435 = scalar_lea.hbm %s2, %s434
          %s436 = sshll.u32 %s426, 4
          %s437 = int_to_ptr.vmem [resolvable:$true] %s436
          %442 = dma.hbm_to_vmem [thread:$0]  %s435, 2048, %s437, %s423, 128, 128, 8
        $region36: #{tpu_custom_call.1} parent=23 // pred_fallthru
          _
        // Predicated region
        $region37: #{tpu_custom_call.1} parent=23 // pred_check
          %p443 = pneg %p150
        $region38: #{tpu_custom_call.1} parent=23 // pred_check_branch
          %445 = sbr.rel (%p443) target = $region40
        $region39: #{tpu_custom_call.1} parent=23 // pred_region
          %s446 = sand.u32 %s36, 1
          %s447 = scalar_lea.sflag [#allocation9], %s446
          %s448 = sand.u32 %s140, 1
          %s449 = smul.addr %s448, 128
          %s450 = scalar_lea.vmem [#allocation8], %s449
          %s451 = smul.u32 4, %s44
          %s453 = ssub.s32 2048, 2048
          %454 = vsyncadd %s447, %s453
          %s455 = smul.addr %s451, 4
          %s456 = smul.addr %s43, 16
          %s457 = sadd.s32 %s455, %s456
          %s458 = smul.addr %s457, 128
          %s459 = scalar_lea.hbm %s3, %s458
          %s460 = sshll.u32 %s450, 4
          %s461 = int_to_ptr.vmem [resolvable:$true] %s460
          %466 = dma.hbm_to_vmem [thread:$0]  %s459, 2048, %s461, %s447, 128, 128, 8
        $region40: #{tpu_custom_call.1} parent=23 // pred_fallthru
          _
        // Predicated region
        $region41: #{tpu_custom_call.1} parent=23 // pred_check
          %p467 = pneg %p176
        $region42: #{tpu_custom_call.1} parent=23 // pred_check_branch
          %469 = sbr.rel (%p467) target = $region44
        $region43: #{tpu_custom_call.1} parent=23 // pred_region
          %s470 = sand.u32 %s36, 1
          %s471 = scalar_lea.sflag [#allocation9], %s470
          %s472 = sand.u32 %s166, 1
          %s473 = smul.addr %s472, 32
          %s474 = scalar_lea.vmem [#allocation10], %s473
          %s476 = ssub.s32 512, 512
          %477 = vsyncadd %s471, %s476
          %s478 = smul.addr %s43, 4
          %s479 = smul.addr %s478, 128
          %s480 = scalar_lea.hbm %s4, %s479
          %s481 = sshll.u32 %s474, 4
          %s482 = int_to_ptr.vmem [resolvable:$true] %s481
          %487 = dma.hbm_to_vmem [thread:$0]  %s480, 512, %s482, %s471, 128, 128, 8
        $region44: #{tpu_custom_call.1} parent=23 // pred_fallthru
          _
        // Predicated region
        $region45: #{tpu_custom_call.1} parent=23 // pred_check
          %p488 = pneg %p204
        $region46: #{tpu_custom_call.1} parent=23 // pred_check_branch
          %490 = sbr.rel (%p488) target = $region48
        $region47: #{tpu_custom_call.1} parent=23 // pred_region
          %s491 = sand.u32 %s36, 1
          %s492 = scalar_lea.sflag [#allocation12], %s491
          %s493 = sand.u32 %s194, 1
          %s494 = smul.addr %s493, 128
          %s495 = scalar_lea.vmem [#allocation11], %s494
          %s496 = smul.u32 4, %s44
          %s498 = ssub.s32 2048, 2048
          %499 = vsyncadd %s492, %s498
          %s500 = smul.addr %s496, 4
          %s501 = smul.addr %s43, 16
          %s502 = sadd.s32 %s500, %s501
          %s503 = smul.addr %s502, 128
          %s504 = scalar_lea.hbm %s5, %s503
          %s505 = sshll.u32 %s495, 4
          %s506 = int_to_ptr.vmem [resolvable:$true] %s505
          %511 = dma.hbm_to_vmem [thread:$0]  %s504, 2048, %s506, %s492, 128, 128, 8
        $region48: #{tpu_custom_call.1} parent=23 // pred_fallthru
          _
        // Predicated region
        $region49: #{tpu_custom_call.1} parent=23 // pred_check
          %p512 = pneg %p232
        $region50: #{tpu_custom_call.1} parent=23 // pred_check_branch
          %514 = sbr.rel (%p512) target = $region52
        $region51: #{tpu_custom_call.1} parent=23 // pred_region
          %s515 = sand.u32 %s36, 1
          %s516 = scalar_lea.sflag [#allocation12], %s515
          %s517 = sand.u32 %s222, 1
          %s518 = smul.addr %s517, 128
          %s519 = scalar_lea.vmem [#allocation13], %s518
          %s520 = smul.u32 4, %s44
          %s522 = ssub.s32 2048, 2048
          %523 = vsyncadd %s516, %s522
          %s524 = smul.addr %s520, 4
          %s525 = smul.addr %s43, 16
          %s526 = sadd.s32 %s524, %s525
          %s527 = smul.addr %s526, 128
          %s528 = scalar_lea.hbm %s6, %s527
          %s529 = sshll.u32 %s519, 4
          %s530 = int_to_ptr.vmem [resolvable:$true] %s529
          %535 = dma.hbm_to_vmem [thread:$0]  %s528, 2048, %s530, %s516, 128, 128, 8
        $region52: #{tpu_custom_call.1} parent=23 // pred_fallthru
          _
      $region24: #{tpu_custom_call.1} parent=5 // pred_fallthru
        _
      %p536 = scmp.le.s32.totalorder 1, %s36
      %p537 = scmp.lt.s32.totalorder %s36, 3
      %p538 = pnand %p536, %p537
      %p539 = pneg %p538
      // Predicated region
      $region53: #{tpu_custom_call.1} parent=5 // pred_check
        _
      $region54: #{tpu_custom_call.1} parent=5 // pred_check_branch
        %541 = sbr.rel (%p538) target = $region56
      $region55: #{tpu_custom_call.1} parent=5 // pred_region
        %s542 = ssub.s32 %s36, 1
        %s543 = sand.u32 %s61, 1
        %s544 = scalar_lea.sflag [#allocation3], %s543
        %s545 = sand.u32 %s61, 1
        %s546 = smul.addr %s545, 32
        %s547 = scalar_lea.vmem [#allocation2], %s546
        // Predicated region
        $region57: #{tpu_custom_call.1} parent=55 // pred_check
          %p548 = pneg %p74
        $region58: #{tpu_custom_call.1} parent=55 // pred_check_branch
          %550 = sbr.rel (%p548) target = $region60
        $region59: #{tpu_custom_call.1} parent=55 // pred_region
          %551 = dma.done %s544, 512
        $region60: #{tpu_custom_call.1} parent=55 // pred_fallthru
          _
        %s552 = sand.u32 %s41, 1
        %s553 = scalar_lea.sflag [#allocation6], %s552
        %s554 = sand.u32 %s87, 1
        %s555 = smul.addr %s554, 32
        %s556 = scalar_lea.vmem [#allocation5], %s555
        // Predicated region
        $region61: #{tpu_custom_call.1} parent=55 // pred_check
          %p557 = pneg %p100
        $region62: #{tpu_custom_call.1} parent=55 // pred_check_branch
          %559 = sbr.rel (%p557) target = $region64
        $region63: #{tpu_custom_call.1} parent=55 // pred_region
          %560 = dma.done %s553, 512
        $region64: #{tpu_custom_call.1} parent=55 // pred_fallthru
          _
        %s561 = sand.u32 %s41, 1
        %s562 = scalar_lea.sflag [#allocation6], %s561
        %s563 = sand.u32 %s115, 1
        %s564 = smul.addr %s563, 128
        %s565 = scalar_lea.vmem [#allocation7], %s564
        // Predicated region
        $region65: #{tpu_custom_call.1} parent=55 // pred_check
          %p566 = pneg %p128
        $region66: #{tpu_custom_call.1} parent=55 // pred_check_branch
          %568 = sbr.rel (%p566) target = $region68
        $region67: #{tpu_custom_call.1} parent=55 // pred_region
          %569 = dma.done %s562, 2048
        $region68: #{tpu_custom_call.1} parent=55 // pred_fallthru
          _
        %s570 = sand.u32 %s41, 1
        %s571 = scalar_lea.sflag [#allocation9], %s570
        %s572 = sand.u32 %s143, 1
        %s573 = smul.addr %s572, 128
        %s574 = scalar_lea.vmem [#allocation8], %s573
        // Predicated region
        $region69: #{tpu_custom_call.1} parent=55 // pred_check
          %p575 = pneg %p156
        $region70: #{tpu_custom_call.1} parent=55 // pred_check_branch
          %577 = sbr.rel (%p575) target = $region72
        $region71: #{tpu_custom_call.1} parent=55 // pred_region
          %578 = dma.done %s571, 2048
        $region72: #{tpu_custom_call.1} parent=55 // pred_fallthru
          _
        %s579 = sand.u32 %s41, 1
        %s580 = scalar_lea.sflag [#allocation9], %s579
        %s581 = sand.u32 %s169, 1
        %s582 = smul.addr %s581, 32
        %s583 = scalar_lea.vmem [#allocation10], %s582
        // Predicated region
        $region73: #{tpu_custom_call.1} parent=55 // pred_check
          %p584 = pneg %p182
        $region74: #{tpu_custom_call.1} parent=55 // pred_check_branch
          %586 = sbr.rel (%p584) target = $region76
        $region75: #{tpu_custom_call.1} parent=55 // pred_region
          %587 = dma.done %s580, 512
        $region76: #{tpu_custom_call.1} parent=55 // pred_fallthru
          _
        %s588 = sand.u32 %s41, 1
        %s589 = scalar_lea.sflag [#allocation12], %s588
        %s590 = sand.u32 %s197, 1
        %s591 = smul.addr %s590, 128
        %s592 = scalar_lea.vmem [#allocation11], %s591
        // Predicated region
        $region77: #{tpu_custom_call.1} parent=55 // pred_check
          %p593 = pneg %p210
        $region78: #{tpu_custom_call.1} parent=55 // pred_check_branch
          %595 = sbr.rel (%p593) target = $region80
        $region79: #{tpu_custom_call.1} parent=55 // pred_region
          %596 = dma.done %s589, 2048
        $region80: #{tpu_custom_call.1} parent=55 // pred_fallthru
          _
        %s597 = sand.u32 %s41, 1
        %s598 = scalar_lea.sflag [#allocation12], %s597
        %s599 = sand.u32 %s225, 1
        %s600 = smul.addr %s599, 128
        %s601 = scalar_lea.vmem [#allocation13], %s600
        // Predicated region
        $region81: #{tpu_custom_call.1} parent=55 // pred_check
          %p602 = pneg %p238
        $region82: #{tpu_custom_call.1} parent=55 // pred_check_branch
          %604 = sbr.rel (%p602) target = $region84
        $region83: #{tpu_custom_call.1} parent=55 // pred_region
          %605 = dma.done %s598, 2048
        $region84: #{tpu_custom_call.1} parent=55 // pred_fallthru
          _
        // Predicated region
        $region85: #{tpu_custom_call.1} parent=55 // pred_check
          %p606 = pneg %p259
        $region86: #{tpu_custom_call.1} parent=55 // pred_check_branch
          %608 = sbr.rel (%p606) target = $region88
        $region87: #{tpu_custom_call.1} parent=55 // pred_region
          %609 = dma.done [#allocation15], 512
        $region88: #{tpu_custom_call.1} parent=55 // pred_fallthru
          _
        // Predicated region
        $region89: #{tpu_custom_call.1} parent=55 // pred_check
          %p610 = pneg %p280
        $region90: #{tpu_custom_call.1} parent=55 // pred_check_branch
          %612 = sbr.rel (%p610) target = $region92
        $region91: #{tpu_custom_call.1} parent=55 // pred_region
          %613 = dma.done [#allocation15], 512
        $region92: #{tpu_custom_call.1} parent=55 // pred_fallthru
          _
        %s614 = sand.u32 %s61, 1
        %s615 = scalar_lea.sflag [#allocation3], %s614
        %s616 = sand.u32 %s61, 1
        %s617 = smul.addr %s616, 32
        %s618 = scalar_lea.vmem [#allocation2], %s617
        %p619 = pneg %p74
        %p620 = pneg %p71
        %s621 = sand.u32 %s41, 1
        %s622 = scalar_lea.sflag [#allocation6], %s621
        %s623 = sand.u32 %s87, 1
        %s624 = smul.addr %s623, 32
        %s625 = scalar_lea.vmem [#allocation5], %s624
        %p626 = pneg %p100
        %p627 = pneg %p97
        %s628 = sand.u32 %s41, 1
        %s629 = scalar_lea.sflag [#allocation6], %s628
        %s630 = sand.u32 %s115, 1
        %s631 = smul.addr %s630, 128
        %s632 = scalar_lea.vmem [#allocation7], %s631
        %p633 = pneg %p128
        %p634 = pneg %p125
        %s635 = sand.u32 %s41, 1
        %s636 = scalar_lea.sflag [#allocation9], %s635
        %s637 = sand.u32 %s143, 1
        %s638 = smul.addr %s637, 128
        %s639 = scalar_lea.vmem [#allocation8], %s638
        %p640 = pneg %p156
        %p641 = pneg %p153
        %s642 = sand.u32 %s41, 1
        %s643 = scalar_lea.sflag [#allocation9], %s642
        %s644 = sand.u32 %s169, 1
        %s645 = smul.addr %s644, 32
        %s646 = scalar_lea.vmem [#allocation10], %s645
        %p647 = pneg %p182
        %p648 = pneg %p179
        %s649 = sand.u32 %s41, 1
        %s650 = scalar_lea.sflag [#allocation12], %s649
        %s651 = sand.u32 %s197, 1
        %s652 = smul.addr %s651, 128
        %s653 = scalar_lea.vmem [#allocation11], %s652
        %p654 = pneg %p210
        %p655 = pneg %p207
        %s656 = sand.u32 %s41, 1
        %s657 = scalar_lea.sflag [#allocation12], %s656
        %s658 = sand.u32 %s225, 1
        %s659 = smul.addr %s658, 128
        %s660 = scalar_lea.vmem [#allocation13], %s659
        %p661 = pneg %p238
        %p662 = pneg %p235
        %p663 = pneg %p259
        %p664 = pneg %p256
        %p665 = pneg %p280
        %p666 = pneg %p277
        %p667 = pneg %p306
        %p668 = pneg %p303
        %s669 = sand.u32 %s293, 1
        %s670 = scalar_lea.sflag [#allocation4], %s669
        %s671 = sand.u32 %s293, 1
        %s672 = smul.addr %s671, 32
        %s673 = scalar_lea.vmem [#allocation17], %s672
        %p674 = pneg %p332
        %p675 = pneg %p329
        %s676 = sand.u32 %s319, 1
        %s677 = scalar_lea.sflag [#allocation19], %s676
        %s678 = sand.u32 %s319, 1
        %s679 = smul.addr %s678, 32
        %s680 = scalar_lea.vmem [#allocation18], %s679
        %s681 = smul.u32 4, %s46
        %s682 = smul.u32 4, %s46
        %s683 = smul.u32 4, %s46
        %s684 = smul.u32 4, %s46
        %v686 = vld [vmem:[%s547] sm:$0xff]
        %v687 = vld [vmem:[%s547 + $0x8] sm:$0xff]
        %v688 = vld [vmem:[%s547 + $0x10] sm:$0xff]
        %v689 = vld [vmem:[%s547 + $0x18] sm:$0xff]
        %v690 = vld [vmem:[%s556] sm:$0xff]
        %v691 = vld [vmem:[%s556 + $0x8] sm:$0xff]
        %v692 = vld [vmem:[%s556 + $0x10] sm:$0xff]
        %v693 = vld [vmem:[%s556 + $0x18] sm:$0xff]
        %v694 = vld [vmem:[%s565] sm:$0xff]
        %v695 = vld [vmem:[%s565 + $0x8] sm:$0xff]
        %v696 = vld [vmem:[%s565 + $0x10] sm:$0xff]
        %v697 = vld [vmem:[%s565 + $0x18] sm:$0xff]
        %v698 = vld [vmem:[%s565 + $0x20] sm:$0xff]
        %v699 = vld [vmem:[%s565 + $0x28] sm:$0xff]
        %v700 = vld [vmem:[%s565 + $0x30] sm:$0xff]
        %v701 = vld [vmem:[%s565 + $0x38] sm:$0xff]
        %v702 = vld [vmem:[%s565 + $0x40] sm:$0xff]
        %v703 = vld [vmem:[%s565 + $0x48] sm:$0xff]
        %v704 = vld [vmem:[%s565 + $0x50] sm:$0xff]
        %v705 = vld [vmem:[%s565 + $0x58] sm:$0xff]
        %v706 = vld [vmem:[%s565 + $0x60] sm:$0xff]
        %v707 = vld [vmem:[%s565 + $0x68] sm:$0xff]
        %v708 = vld [vmem:[%s565 + $0x70] sm:$0xff]
        %v709 = vld [vmem:[%s565 + $0x78] sm:$0xff]
        %v710 = vld [vmem:[%s574] sm:$0xff]
        %v711 = vld [vmem:[%s574 + $0x8] sm:$0xff]
        %v712 = vld [vmem:[%s574 + $0x10] sm:$0xff]
        %v713 = vld [vmem:[%s574 + $0x18] sm:$0xff]
        %v714 = vld [vmem:[%s574 + $0x20] sm:$0xff]
        %v715 = vld [vmem:[%s574 + $0x28] sm:$0xff]
        %v716 = vld [vmem:[%s574 + $0x30] sm:$0xff]
        %v717 = vld [vmem:[%s574 + $0x38] sm:$0xff]
        %v718 = vld [vmem:[%s574 + $0x40] sm:$0xff]
        %v719 = vld [vmem:[%s574 + $0x48] sm:$0xff]
        %v720 = vld [vmem:[%s574 + $0x50] sm:$0xff]
        %v721 = vld [vmem:[%s574 + $0x58] sm:$0xff]
        %v722 = vld [vmem:[%s574 + $0x60] sm:$0xff]
        %v723 = vld [vmem:[%s574 + $0x68] sm:$0xff]
        %v724 = vld [vmem:[%s574 + $0x70] sm:$0xff]
        %v725 = vld [vmem:[%s574 + $0x78] sm:$0xff]
        %v726 = vld [vmem:[#allocation14] sm:$0xf]
        %v727 = vld [vmem:[#allocation14 + $0x4] sm:$0xf]
        %v728 = vld [vmem:[#allocation14 + $0x8] sm:$0xf]
        %v729 = vld [vmem:[#allocation14 + $0xc] sm:$0xf]
        %v730 = vld [vmem:[#allocation14 + $0x10] sm:$0xf]
        %v731 = vld [vmem:[#allocation14 + $0x14] sm:$0xf]
        %v732 = vld [vmem:[#allocation14 + $0x18] sm:$0xf]
        %v733 = vld [vmem:[#allocation14 + $0x1c] sm:$0xf]
        %v734 = vld [vmem:[#allocation16] sm:$0xf]
        %v735 = vld [vmem:[#allocation16 + $0x4] sm:$0xf]
        %v736 = vld [vmem:[#allocation16 + $0x8] sm:$0xf]
        %v737 = vld [vmem:[#allocation16 + $0xc] sm:$0xf]
        %v738 = vld [vmem:[#allocation16 + $0x10] sm:$0xf]
        %v739 = vld [vmem:[#allocation16 + $0x14] sm:$0xf]
        %v740 = vld [vmem:[#allocation16 + $0x18] sm:$0xf]
        %v741 = vld [vmem:[#allocation16 + $0x1c] sm:$0xf]
        %v742 = vmul.f32 %v694, %v686
        %v743 = vmul.f32 %v695, %v687
        %v744 = vmul.f32 %v696, %v688
        %v745 = vmul.f32 %v697, %v689
        %v746 = vmul.f32 %v698, %v686
        %v747 = vmul.f32 %v699, %v687
        %v748 = vmul.f32 %v700, %v688
        %v749 = vmul.f32 %v701, %v689
        %v750 = vmul.f32 %v702, %v686
        %v751 = vmul.f32 %v703, %v687
        %v752 = vmul.f32 %v704, %v688
        %v753 = vmul.f32 %v705, %v689
        %v754 = vmul.f32 %v706, %v686
        %v755 = vmul.f32 %v707, %v687
        %v756 = vmul.f32 %v708, %v688
        %v757 = vmul.f32 %v709, %v689
        %v758 = vmul.f32 %v710, %v690
        %v759 = vmul.f32 %v711, %v691
        %v760 = vmul.f32 %v712, %v692
        %v761 = vmul.f32 %v713, %v693
        %v762 = vmul.f32 %v714, %v690
        %v763 = vmul.f32 %v715, %v691
        %v764 = vmul.f32 %v716, %v692
        %v765 = vmul.f32 %v717, %v693
        %v766 = vmul.f32 %v718, %v690
        %v767 = vmul.f32 %v719, %v691
        %v768 = vmul.f32 %v720, %v692
        %v769 = vmul.f32 %v721, %v693
        %v770 = vmul.f32 %v722, %v690
        %v771 = vmul.f32 %v723, %v691
        %v772 = vmul.f32 %v724, %v692
        %v773 = vmul.f32 %v725, %v693
        %v774 = vsub.f32 %v742, %v758
        %v775 = vsub.f32 %v743, %v759
        %v776 = vsub.f32 %v744, %v760
        %v777 = vsub.f32 %v745, %v761
        %v778 = vsub.f32 %v746, %v762
        %v779 = vsub.f32 %v747, %v763
        %v780 = vsub.f32 %v748, %v764
        %v781 = vsub.f32 %v749, %v765
        %v782 = vsub.f32 %v750, %v766
        %v783 = vsub.f32 %v751, %v767
        %v784 = vsub.f32 %v752, %v768
        %v785 = vsub.f32 %v753, %v769
        %v786 = vsub.f32 %v754, %v770
        %v787 = vsub.f32 %v755, %v771
        %v788 = vsub.f32 %v756, %v772
        %v789 = vsub.f32 %v757, %v773
        %v790 = vmul.f32 %v694, %v690
        %v791 = vmul.f32 %v695, %v691
        %v792 = vmul.f32 %v696, %v692
        %v793 = vmul.f32 %v697, %v693
        %v794 = vmul.f32 %v698, %v690
        %v795 = vmul.f32 %v699, %v691
        %v796 = vmul.f32 %v700, %v692
        %v797 = vmul.f32 %v701, %v693
        %v798 = vmul.f32 %v702, %v690
        %v799 = vmul.f32 %v703, %v691
        %v800 = vmul.f32 %v704, %v692
        %v801 = vmul.f32 %v705, %v693
        %v802 = vmul.f32 %v706, %v690
        %v803 = vmul.f32 %v707, %v691
        %v804 = vmul.f32 %v708, %v692
        %v805 = vmul.f32 %v709, %v693
        %v806 = vmul.f32 %v710, %v686
        %v807 = vmul.f32 %v711, %v687
        %v808 = vmul.f32 %v712, %v688
        %v809 = vmul.f32 %v713, %v689
        %v810 = vmul.f32 %v714, %v686
        %v811 = vmul.f32 %v715, %v687
        %v812 = vmul.f32 %v716, %v688
        %v813 = vmul.f32 %v717, %v689
        %v814 = vmul.f32 %v718, %v686
        %v815 = vmul.f32 %v719, %v687
        %v816 = vmul.f32 %v720, %v688
        %v817 = vmul.f32 %v721, %v689
        %v818 = vmul.f32 %v722, %v686
        %v819 = vmul.f32 %v723, %v687
        %v820 = vmul.f32 %v724, %v688
        %v821 = vmul.f32 %v725, %v689
        %v822 = vadd.f32 %v790, %v806
        %v823 = vadd.f32 %v791, %v807
        %v824 = vadd.f32 %v792, %v808
        %v825 = vadd.f32 %v793, %v809
        %v826 = vadd.f32 %v794, %v810
        %v827 = vadd.f32 %v795, %v811
        %v828 = vadd.f32 %v796, %v812
        %v829 = vadd.f32 %v797, %v813
        %v830 = vadd.f32 %v798, %v814
        %v831 = vadd.f32 %v799, %v815
        %v832 = vadd.f32 %v800, %v816
        %v833 = vadd.f32 %v801, %v817
        %v834 = vadd.f32 %v802, %v818
        %v835 = vadd.f32 %v803, %v819
        %v836 = vadd.f32 %v804, %v820
        %v837 = vadd.f32 %v805, %v821
        %854 = vrot.lane.b32.xlu0 %v822, 32
        %v855 = vpop.permute.xlu0 %854
        %856 = vrot.lane.b32.xlu0 %v823, 32
        %v857 = vpop.permute.xlu0 %856
        %858 = vrot.lane.b32.xlu0 %v824, 32
        %v859 = vpop.permute.xlu0 %858
        %860 = vrot.lane.b32.xlu0 %v825, 32
        %v861 = vpop.permute.xlu0 %860
        %862 = vrot.lane.b32.xlu0 %v826, 32
        %v863 = vpop.permute.xlu0 %862
        %864 = vrot.lane.b32.xlu0 %v827, 32
        %v865 = vpop.permute.xlu0 %864
        %866 = vrot.lane.b32.xlu0 %v828, 32
        %v867 = vpop.permute.xlu0 %866
        %868 = vrot.lane.b32.xlu0 %v829, 32
        %v869 = vpop.permute.xlu0 %868
        %870 = vrot.lane.b32.xlu0 %v830, 32
        %v871 = vpop.permute.xlu0 %870
        %872 = vrot.lane.b32.xlu0 %v831, 32
        %v873 = vpop.permute.xlu0 %872
        %874 = vrot.lane.b32.xlu0 %v832, 32
        %v875 = vpop.permute.xlu0 %874
        %876 = vrot.lane.b32.xlu0 %v833, 32
        %v877 = vpop.permute.xlu0 %876
        %878 = vrot.lane.b32.xlu0 %v834, 32
        %v879 = vpop.permute.xlu0 %878
        %880 = vrot.lane.b32.xlu0 %v835, 32
        %v881 = vpop.permute.xlu0 %880
        %882 = vrot.lane.b32.xlu0 %v836, 32
        %v883 = vpop.permute.xlu0 %882
        %884 = vrot.lane.b32.xlu0 %v837, 32
        %v885 = vpop.permute.xlu0 %884
        %vm902 = vcmask 261120
        %v903 = vsel %vm902, %v774, %v855
        %v904 = vsel %vm902, %v775, %v857
        %v905 = vsel %vm902, %v776, %v859
        %v906 = vsel %vm902, %v777, %v861
        %v907 = vsel %vm902, %v778, %v863
        %v908 = vsel %vm902, %v779, %v865
        %v909 = vsel %vm902, %v780, %v867
        %v910 = vsel %vm902, %v781, %v869
        %v911 = vsel %vm902, %v782, %v871
        %v912 = vsel %vm902, %v783, %v873
        %v913 = vsel %vm902, %v784, %v875
        %v914 = vsel %vm902, %v785, %v877
        %v915 = vsel %vm902, %v786, %v879
        %v916 = vsel %vm902, %v787, %v881
        %v917 = vsel %vm902, %v788, %v883
        %v918 = vsel %vm902, %v789, %v885
        %v919 = vpack.c.bf16 %v904, %v903
        %v920 = vpack.c.bf16 %v906, %v905
        %v921 = vpack.c.bf16 %v908, %v907
        %v922 = vpack.c.bf16 %v910, %v909
        %v923 = vpack.c.bf16 %v912, %v911
        %v924 = vpack.c.bf16 %v914, %v913
        %v925 = vpack.c.bf16 %v916, %v915
        %v926 = vpack.c.bf16 %v918, %v917
        %v935 = vunpack.c.l.b16 %v726
        %v936 = vunpack.c.l.b16 %v727
        %v937 = vunpack.c.l.b16 %v728
        %v938 = vunpack.c.l.b16 %v729
        %v939 = vunpack.c.l.b16 %v730
        %v940 = vunpack.c.l.b16 %v731
        %v941 = vunpack.c.l.b16 %v732
        %v942 = vunpack.c.l.b16 %v733
        %v943 = vpack.c.b16 %v936, %v935
        %v944 = vpack.c.b16 %v938, %v937
        %v945 = vpack.c.b16 %v940, %v939
        %v946 = vpack.c.b16 %v942, %v941
        %vm951 = vcmask 523264
        %v953 = vsel %vm951, %v919, 0
        %v956 = vsel %vm951, %v920, 0
        %v959 = vsel %vm951, %v921, 0
        %v962 = vsel %vm951, %v922, 0
        %v965 = vsel %vm951, %v923, 0
        %v968 = vsel %vm951, %v924, 0
        %v971 = vsel %vm951, %v925, 0
        %v974 = vsel %vm951, %v926, 0
        %976 = vmatprep.subr.bf16.mxu0 0
        %977 = vmatpush1.bf16.msra.mxu0 %v943
        %978 = vmatprep.subr.bf16.mxu0 0
        %979 = vmatpush1.bf16.msra.mxu0 %v944
        %980 = vmatprep.subr.bf16.mxu0 0
        %981 = vmatpush1.bf16.msra.mxu0 %v945
        %982 = vmatprep.subr.bf16.mxu0 0
        %983 = vmatpush1.bf16.msra.mxu0 %v946
        %984 = vmatprep.subr.bf16.mxu0 0
        %985 = vmatpush1.bf16.msra.mxu0 0
        %986 = vmatprep.subr.bf16.mxu0 0
        %987 = vmatpush1.bf16.msra.mxu0 0
        %988 = vmatprep.subr.bf16.mxu0 0
        %989 = vmatpush1.bf16.msra.mxu0 0
        %990 = vmatprep.subr.bf16.mxu0 0
        %991 = vmatpush1.bf16.msra.mxu0 0
        %992 = vmatprep.subr.bf16.mxu0 0
        %993 = vmatpush1.bf16.msra.mxu0 0
        %994 = vmatprep.subr.bf16.mxu0 0
        %995 = vmatpush1.bf16.msra.mxu0 0
        %996 = vmatprep.subr.bf16.mxu0 0
        %997 = vmatpush1.bf16.msra.mxu0 0
        %998 = vmatprep.subr.bf16.mxu0 0
        %999 = vmatpush1.bf16.msra.mxu0 0
        %1000 = vmatprep.subr.bf16.mxu0 0
        %1001 = vmatpush1.bf16.msra.mxu0 0
        %1002 = vmatprep.subr.bf16.mxu0 0
        %1003 = vmatpush1.bf16.msra.mxu0 0
        %1004 = vmatprep.subr.bf16.mxu0 0
        %1005 = vmatpush1.bf16.msra.mxu0 0
        %1006 = vmatprep.subr.bf16.mxu0 0
        %1007 = vmatpush1.bf16.msra.mxu0 0
        %1008 = vmatprep.mubr.bf16.mxu0 0
        %1009 = vmatmul.mubr.bf16.gmra.mrb[0].mxu0 %v953
        %v1010 = vpop.f32.mrb[0].mxu0
        %v1011 = vadd.f32 0.0, %v1010
        %v1012 = vpop.f32.mrb[0].mxu0
        %v1013 = vpop.f32.mrb[0].mxu0
        %v1014 = vadd.f32 0.0, %v1013
        %v1015 = vpop.f32.mrb[0].mxu0
        %1016 = vmatprep.mubr.bf16.mxu0 0
        %1017 = vmatmul.mubr.bf16.gmra.mrb[0].mxu0 %v956
        %v1018 = vpop.f32.mrb[0].mxu0
        %v1019 = vadd.f32 0.0, %v1018
        %v1020 = vpop.f32.mrb[0].mxu0
        %v1021 = vpop.f32.mrb[0].mxu0
        %v1022 = vadd.f32 0.0, %v1021
        %v1023 = vpop.f32.mrb[0].mxu0
        %1024 = vmatprep.mubr.bf16.mxu0 0
        %1025 = vmatmul.mubr.bf16.gmra.mrb[0].mxu0 %v959
        %v1026 = vpop.f32.mrb[0].mxu0
        %v1027 = vadd.f32 0.0, %v1026
        %v1028 = vpop.f32.mrb[0].mxu0
        %v1029 = vpop.f32.mrb[0].mxu0
        %v1030 = vadd.f32 0.0, %v1029
        %v1031 = vpop.f32.mrb[0].mxu0
        %1032 = vmatprep.mubr.bf16.mxu0 0
        %1033 = vmatmul.mubr.bf16.gmra.mrb[0].mxu0 %v962
        %v1034 = vpop.f32.mrb[0].mxu0
        %v1035 = vadd.f32 0.0, %v1034
        %v1036 = vpop.f32.mrb[0].mxu0
        %v1037 = vpop.f32.mrb[0].mxu0
        %v1038 = vadd.f32 0.0, %v1037
        %v1039 = vpop.f32.mrb[0].mxu0
        %1040 = vmatprep.mubr.bf16.mxu0 0
        %1041 = vmatmul.mubr.bf16.gmra.mrb[0].mxu0 %v965
        %v1042 = vpop.f32.mrb[0].mxu0
        %v1043 = vadd.f32 0.0, %v1042
        %v1044 = vpop.f32.mrb[0].mxu0
        %v1045 = vpop.f32.mrb[0].mxu0
        %v1046 = vadd.f32 0.0, %v1045
        %v1047 = vpop.f32.mrb[0].mxu0
        %1048 = vmatprep.mubr.bf16.mxu0 0
        %1049 = vmatmul.mubr.bf16.gmra.mrb[0].mxu0 %v968
        %v1050 = vpop.f32.mrb[0].mxu0
        %v1051 = vadd.f32 0.0, %v1050
        %v1052 = vpop.f32.mrb[0].mxu0
        %v1053 = vpop.f32.mrb[0].mxu0
        %v1054 = vadd.f32 0.0, %v1053
        %v1055 = vpop.f32.mrb[0].mxu0
        %1056 = vmatprep.mubr.bf16.mxu0 0
        %1057 = vmatmul.mubr.bf16.gmra.mrb[0].mxu0 %v971
        %v1058 = vpop.f32.mrb[0].mxu0
        %v1059 = vadd.f32 0.0, %v1058
        %v1060 = vpop.f32.mrb[0].mxu0
        %v1061 = vpop.f32.mrb[0].mxu0
        %v1062 = vadd.f32 0.0, %v1061
        %v1063 = vpop.f32.mrb[0].mxu0
        %1064 = vmatprep.mubr.bf16.mxu0 0
        %1065 = vmatmul.mubr.bf16.gmra.mrb[0].mxu0 %v974
        %v1066 = vpop.f32.mrb[0].mxu0
        %v1067 = vadd.f32 0.0, %v1066
        %v1068 = vpop.f32.mrb[0].mxu0
        %v1069 = vpop.f32.mrb[0].mxu0
        %v1070 = vadd.f32 0.0, %v1069
        %v1071 = vpop.f32.mrb[0].mxu0
        %1072 = vdwg.mxu0
        %1073 = vxpose.xlu0.b32.start [1/16] %v1011, 128
        %1074 = vxpose.xlu0.b32.cont [2/16] %v1014, 128
        %1075 = vxpose.xlu0.b32.cont [3/16] %v1019, 128
        %1076 = vxpose.xlu0.b32.cont [4/16] %v1022, 128
        %1077 = vxpose.xlu0.b32.cont [5/16] 0.0, 128
        %1078 = vxpose.xlu0.b32.cont [6/16] 0.0, 128
        %1079 = vxpose.xlu0.b32.cont [7/16] 0.0, 128
        %1080 = vxpose.xlu0.b32.cont [8/16] 0.0, 128
        %1081 = vxpose.xlu0.b32.cont [9/16] 0.0, 128
        %1082 = vxpose.xlu0.b32.cont [10/16] 0.0, 128
        %1083 = vxpose.xlu0.b32.cont [11/16] 0.0, 128
        %1084 = vxpose.xlu0.b32.cont [12/16] 0.0, 128
        %1085 = vxpose.xlu0.b32.cont [13/16] 0.0, 128
        %1086 = vxpose.xlu0.b32.cont [14/16] 0.0, 128
        %1087 = vxpose.xlu0.b32.cont [15/16] 0.0, 128
        %1088 = vxpose.xlu0.b32.end [16/16] 0.0, 128
        %v1089 = vpop.trf.xlu0
        %v1090 = vpop.trf.xlu0
        %v1091 = vpop.trf.xlu0
        %v1092 = vpop.trf.xlu0
        %v1093 = vpop.trf.xlu0
        %v1094 = vpop.trf.xlu0
        %v1095 = vpop.trf.xlu0
        %v1096 = vpop.trf.xlu0
        %v1097 = vpop.trf.xlu0
        %v1098 = vpop.trf.xlu0
        %v1099 = vpop.trf.xlu0
        %v1100 = vpop.trf.xlu0
        %v1101 = vpop.trf.xlu0
        %v1102 = vpop.trf.xlu0
        %v1103 = vpop.trf.xlu0
        %v1104 = vpop.trf.xlu0
        %1105 = vxpose.xlu0.b32.start [1/16] %v1027, 128
        %1106 = vxpose.xlu0.b32.cont [2/16] %v1030, 128
        %1107 = vxpose.xlu0.b32.cont [3/16] %v1035, 128
        %1108 = vxpose.xlu0.b32.cont [4/16] %v1038, 128
        %1109 = vxpose.xlu0.b32.cont [5/16] 0.0, 128
        %1110 = vxpose.xlu0.b32.cont [6/16] 0.0, 128
        %1111 = vxpose.xlu0.b32.cont [7/16] 0.0, 128
        %1112 = vxpose.xlu0.b32.cont [8/16] 0.0, 128
        %1113 = vxpose.xlu0.b32.cont [9/16] 0.0, 128
        %1114 = vxpose.xlu0.b32.cont [10/16] 0.0, 128
        %1115 = vxpose.xlu0.b32.cont [11/16] 0.0, 128
        %1116 = vxpose.xlu0.b32.cont [12/16] 0.0, 128
        %1117 = vxpose.xlu0.b32.cont [13/16] 0.0, 128
        %1118 = vxpose.xlu0.b32.cont [14/16] 0.0, 128
        %1119 = vxpose.xlu0.b32.cont [15/16] 0.0, 128
        %1120 = vxpose.xlu0.b32.end [16/16] 0.0, 128
        %v1121 = vpop.trf.xlu0
        %v1122 = vpop.trf.xlu0
        %v1123 = vpop.trf.xlu0
        %v1124 = vpop.trf.xlu0
        %v1125 = vpop.trf.xlu0
        %v1126 = vpop.trf.xlu0
        %v1127 = vpop.trf.xlu0
        %v1128 = vpop.trf.xlu0
        %v1129 = vpop.trf.xlu0
        %v1130 = vpop.trf.xlu0
        %v1131 = vpop.trf.xlu0
        %v1132 = vpop.trf.xlu0
        %v1133 = vpop.trf.xlu0
        %v1134 = vpop.trf.xlu0
        %v1135 = vpop.trf.xlu0
        %v1136 = vpop.trf.xlu0
        %1137 = vxpose.xlu0.b32.start [1/16] %v1043, 128
        %1138 = vxpose.xlu0.b32.cont [2/16] %v1046, 128
        %1139 = vxpose.xlu0.b32.cont [3/16] %v1051, 128
        %1140 = vxpose.xlu0.b32.cont [4/16] %v1054, 128
        %1141 = vxpose.xlu0.b32.cont [5/16] 0.0, 128
        %1142 = vxpose.xlu0.b32.cont [6/16] 0.0, 128
        %1143 = vxpose.xlu0.b32.cont [7/16] 0.0, 128
        %1144 = vxpose.xlu0.b32.cont [8/16] 0.0, 128
        %1145 = vxpose.xlu0.b32.cont [9/16] 0.0, 128
        %1146 = vxpose.xlu0.b32.cont [10/16] 0.0, 128
        %1147 = vxpose.xlu0.b32.cont [11/16] 0.0, 128
        %1148 = vxpose.xlu0.b32.cont [12/16] 0.0, 128
        %1149 = vxpose.xlu0.b32.cont [13/16] 0.0, 128
        %1150 = vxpose.xlu0.b32.cont [14/16] 0.0, 128
        %1151 = vxpose.xlu0.b32.cont [15/16] 0.0, 128
        %1152 = vxpose.xlu0.b32.end [16/16] 0.0, 128
        %v1153 = vpop.trf.xlu0
        %v1154 = vpop.trf.xlu0
        %v1155 = vpop.trf.xlu0
        %v1156 = vpop.trf.xlu0
        %v1157 = vpop.trf.xlu0
        %v1158 = vpop.trf.xlu0
        %v1159 = vpop.trf.xlu0
        %v1160 = vpop.trf.xlu0
        %v1161 = vpop.trf.xlu0
        %v1162 = vpop.trf.xlu0
        %v1163 = vpop.trf.xlu0
        %v1164 = vpop.trf.xlu0
        %v1165 = vpop.trf.xlu0
        %v1166 = vpop.trf.xlu0
        %v1167 = vpop.trf.xlu0
        %v1168 = vpop.trf.xlu0
        %1169 = vxpose.xlu0.b32.start [1/16] %v1059, 128
        %1170 = vxpose.xlu0.b32.cont [2/16] %v1062, 128
        %1171 = vxpose.xlu0.b32.cont [3/16] %v1067, 128
        %1172 = vxpose.xlu0.b32.cont [4/16] %v1070, 128
        %1173 = vxpose.xlu0.b32.cont [5/16] 0.0, 128
        %1174 = vxpose.xlu0.b32.cont [6/16] 0.0, 128
        %1175 = vxpose.xlu0.b32.cont [7/16] 0.0, 128
        %1176 = vxpose.xlu0.b32.cont [8/16] 0.0, 128
        %1177 = vxpose.xlu0.b32.cont [9/16] 0.0, 128
        %1178 = vxpose.xlu0.b32.cont [10/16] 0.0, 128
        %1179 = vxpose.xlu0.b32.cont [11/16] 0.0, 128
        %1180 = vxpose.xlu0.b32.cont [12/16] 0.0, 128
        %1181 = vxpose.xlu0.b32.cont [13/16] 0.0, 128
        %1182 = vxpose.xlu0.b32.cont [14/16] 0.0, 128
        %1183 = vxpose.xlu0.b32.cont [15/16] 0.0, 128
        %1184 = vxpose.xlu0.b32.end [16/16] 0.0, 128
        %v1185 = vpop.trf.xlu0
        %v1186 = vpop.trf.xlu0
        %v1187 = vpop.trf.xlu0
        %v1188 = vpop.trf.xlu0
        %v1189 = vpop.trf.xlu0
        %v1190 = vpop.trf.xlu0
        %v1191 = vpop.trf.xlu0
        %v1192 = vpop.trf.xlu0
        %v1193 = vpop.trf.xlu0
        %v1194 = vpop.trf.xlu0
        %v1195 = vpop.trf.xlu0
        %v1196 = vpop.trf.xlu0
        %v1197 = vpop.trf.xlu0
        %v1198 = vpop.trf.xlu0
        %v1199 = vpop.trf.xlu0
        %v1200 = vpop.trf.xlu0
        %1217 = vrot.lane.b32.xlu0 %v1011, 96
        %v1218 = vpop.permute.xlu0 %1217
        %1219 = vrot.lane.b32.xlu0 %v1014, 96
        %v1220 = vpop.permute.xlu0 %1219
        %1221 = vrot.lane.b32.xlu0 %v1019, 96
        %v1222 = vpop.permute.xlu0 %1221
        %1223 = vrot.lane.b32.xlu0 %v1022, 96
        %v1224 = vpop.permute.xlu0 %1223
        %1225 = vrot.lane.b32.xlu0 %v1027, 96
        %v1226 = vpop.permute.xlu0 %1225
        %1227 = vrot.lane.b32.xlu0 %v1030, 96
        %v1228 = vpop.permute.xlu0 %1227
        %1229 = vrot.lane.b32.xlu0 %v1035, 96
        %v1230 = vpop.permute.xlu0 %1229
        %1231 = vrot.lane.b32.xlu0 %v1038, 96
        %v1232 = vpop.permute.xlu0 %1231
        %1233 = vrot.lane.b32.xlu0 %v1043, 96
        %v1234 = vpop.permute.xlu0 %1233
        %1235 = vrot.lane.b32.xlu0 %v1046, 96
        %v1236 = vpop.permute.xlu0 %1235
        %1237 = vrot.lane.b32.xlu0 %v1051, 96
        %v1238 = vpop.permute.xlu0 %1237
        %1239 = vrot.lane.b32.xlu0 %v1054, 96
        %v1240 = vpop.permute.xlu0 %1239
        %1241 = vrot.lane.b32.xlu0 %v1059, 96
        %v1242 = vpop.permute.xlu0 %1241
        %1243 = vrot.lane.b32.xlu0 %v1062, 96
        %v1244 = vpop.permute.xlu0 %1243
        %1245 = vrot.lane.b32.xlu0 %v1067, 96
        %v1246 = vpop.permute.xlu0 %1245
        %1247 = vrot.lane.b32.xlu0 %v1070, 96
        %v1248 = vpop.permute.xlu0 %1247
        %1265 = vxpose.xlu0.b32.start [1/16] %v1218, 128
        %1266 = vxpose.xlu0.b32.cont [2/16] %v1220, 128
        %1267 = vxpose.xlu0.b32.cont [3/16] %v1222, 128
        %1268 = vxpose.xlu0.b32.cont [4/16] %v1224, 128
        %1269 = vxpose.xlu0.b32.cont [5/16] 0.0, 128
        %1270 = vxpose.xlu0.b32.cont [6/16] 0.0, 128
        %1271 = vxpose.xlu0.b32.cont [7/16] 0.0, 128
        %1272 = vxpose.xlu0.b32.cont [8/16] 0.0, 128
        %1273 = vxpose.xlu0.b32.cont [9/16] 0.0, 128
        %1274 = vxpose.xlu0.b32.cont [10/16] 0.0, 128
        %1275 = vxpose.xlu0.b32.cont [11/16] 0.0, 128
        %1276 = vxpose.xlu0.b32.cont [12/16] 0.0, 128
        %1277 = vxpose.xlu0.b32.cont [13/16] 0.0, 128
        %1278 = vxpose.xlu0.b32.cont [14/16] 0.0, 128
        %1279 = vxpose.xlu0.b32.cont [15/16] 0.0, 128
        %1280 = vxpose.xlu0.b32.end [16/16] 0.0, 128
        %v1281 = vpop.trf.xlu0
        %v1282 = vpop.trf.xlu0
        %v1283 = vpop.trf.xlu0
        %v1284 = vpop.trf.xlu0
        %v1285 = vpop.trf.xlu0
        %v1286 = vpop.trf.xlu0
        %v1287 = vpop.trf.xlu0
        %v1288 = vpop.trf.xlu0
        %v1289 = vpop.trf.xlu0
        %v1290 = vpop.trf.xlu0
        %v1291 = vpop.trf.xlu0
        %v1292 = vpop.trf.xlu0
        %v1293 = vpop.trf.xlu0
        %v1294 = vpop.trf.xlu0
        %v1295 = vpop.trf.xlu0
        %v1296 = vpop.trf.xlu0
        %1297 = vxpose.xlu0.b32.start [1/16] %v1226, 128
        %1298 = vxpose.xlu0.b32.cont [2/16] %v1228, 128
        %1299 = vxpose.xlu0.b32.cont [3/16] %v1230, 128
        %1300 = vxpose.xlu0.b32.cont [4/16] %v1232, 128
        %1301 = vxpose.xlu0.b32.cont [5/16] 0.0, 128
        %1302 = vxpose.xlu0.b32.cont [6/16] 0.0, 128
        %1303 = vxpose.xlu0.b32.cont [7/16] 0.0, 128
        %1304 = vxpose.xlu0.b32.cont [8/16] 0.0, 128
        %1305 = vxpose.xlu0.b32.cont [9/16] 0.0, 128
        %1306 = vxpose.xlu0.b32.cont [10/16] 0.0, 128
        %1307 = vxpose.xlu0.b32.cont [11/16] 0.0, 128
        %1308 = vxpose.xlu0.b32.cont [12/16] 0.0, 128
        %1309 = vxpose.xlu0.b32.cont [13/16] 0.0, 128
        %1310 = vxpose.xlu0.b32.cont [14/16] 0.0, 128
        %1311 = vxpose.xlu0.b32.cont [15/16] 0.0, 128
        %1312 = vxpose.xlu0.b32.end [16/16] 0.0, 128
        %v1313 = vpop.trf.xlu0
        %v1314 = vpop.trf.xlu0
        %v1315 = vpop.trf.xlu0
        %v1316 = vpop.trf.xlu0
        %v1317 = vpop.trf.xlu0
        %v1318 = vpop.trf.xlu0
        %v1319 = vpop.trf.xlu0
        %v1320 = vpop.trf.xlu0
        %v1321 = vpop.trf.xlu0
        %v1322 = vpop.trf.xlu0
        %v1323 = vpop.trf.xlu0
        %v1324 = vpop.trf.xlu0
        %v1325 = vpop.trf.xlu0
        %v1326 = vpop.trf.xlu0
        %v1327 = vpop.trf.xlu0
        %v1328 = vpop.trf.xlu0
        %1329 = vxpose.xlu0.b32.start [1/16] %v1234, 128
        %1330 = vxpose.xlu0.b32.cont [2/16] %v1236, 128
        %1331 = vxpose.xlu0.b32.cont [3/16] %v1238, 128
        %1332 = vxpose.xlu0.b32.cont [4/16] %v1240, 128
        %1333 = vxpose.xlu0.b32.cont [5/16] 0.0, 128
        %1334 = vxpose.xlu0.b32.cont [6/16] 0.0, 128
        %1335 = vxpose.xlu0.b32.cont [7/16] 0.0, 128
        %1336 = vxpose.xlu0.b32.cont [8/16] 0.0, 128
        %1337 = vxpose.xlu0.b32.cont [9/16] 0.0, 128
        %1338 = vxpose.xlu0.b32.cont [10/16] 0.0, 128
        %1339 = vxpose.xlu0.b32.cont [11/16] 0.0, 128
        %1340 = vxpose.xlu0.b32.cont [12/16] 0.0, 128
        %1341 = vxpose.xlu0.b32.cont [13/16] 0.0, 128
        %1342 = vxpose.xlu0.b32.cont [14/16] 0.0, 128
        %1343 = vxpose.xlu0.b32.cont [15/16] 0.0, 128
        %1344 = vxpose.xlu0.b32.end [16/16] 0.0, 128
        %v1345 = vpop.trf.xlu0
        %v1346 = vpop.trf.xlu0
        %v1347 = vpop.trf.xlu0
        %v1348 = vpop.trf.xlu0
        %v1349 = vpop.trf.xlu0
        %v1350 = vpop.trf.xlu0
        %v1351 = vpop.trf.xlu0
        %v1352 = vpop.trf.xlu0
        %v1353 = vpop.trf.xlu0
        %v1354 = vpop.trf.xlu0
        %v1355 = vpop.trf.xlu0
        %v1356 = vpop.trf.xlu0
        %v1357 = vpop.trf.xlu0
        %v1358 = vpop.trf.xlu0
        %v1359 = vpop.trf.xlu0
        %v1360 = vpop.trf.xlu0
        %1361 = vxpose.xlu0.b32.start [1/16] %v1242, 128
        %1362 = vxpose.xlu0.b32.cont [2/16] %v1244, 128
        %1363 = vxpose.xlu0.b32.cont [3/16] %v1246, 128
        %1364 = vxpose.xlu0.b32.cont [4/16] %v1248, 128
        %1365 = vxpose.xlu0.b32.cont [5/16] 0.0, 128
        %1366 = vxpose.xlu0.b32.cont [6/16] 0.0, 128
        %1367 = vxpose.xlu0.b32.cont [7/16] 0.0, 128
        %1368 = vxpose.xlu0.b32.cont [8/16] 0.0, 128
        %1369 = vxpose.xlu0.b32.cont [9/16] 0.0, 128
        %1370 = vxpose.xlu0.b32.cont [10/16] 0.0, 128
        %1371 = vxpose.xlu0.b32.cont [11/16] 0.0, 128
        %1372 = vxpose.xlu0.b32.cont [12/16] 0.0, 128
        %1373 = vxpose.xlu0.b32.cont [13/16] 0.0, 128
        %1374 = vxpose.xlu0.b32.cont [14/16] 0.0, 128
        %1375 = vxpose.xlu0.b32.cont [15/16] 0.0, 128
        %1376 = vxpose.xlu0.b32.end [16/16] 0.0, 128
        %v1377 = vpop.trf.xlu0
        %v1378 = vpop.trf.xlu0
        %v1379 = vpop.trf.xlu0
        %v1380 = vpop.trf.xlu0
        %v1381 = vpop.trf.xlu0
        %v1382 = vpop.trf.xlu0
        %v1383 = vpop.trf.xlu0
        %v1384 = vpop.trf.xlu0
        %v1385 = vpop.trf.xlu0
        %v1386 = vpop.trf.xlu0
        %v1387 = vpop.trf.xlu0
        %v1388 = vpop.trf.xlu0
        %v1389 = vpop.trf.xlu0
        %v1390 = vpop.trf.xlu0
        %v1391 = vpop.trf.xlu0
        %v1392 = vpop.trf.xlu0
        %1409 = vrot.lane.b32.xlu0 %v1281, 32
        %v1410 = vpop.permute.xlu0 %1409
        %1411 = vrot.lane.b32.xlu0 %v1282, 32
        %v1412 = vpop.permute.xlu0 %1411
        %1413 = vrot.lane.b32.xlu0 %v1283, 32
        %v1414 = vpop.permute.xlu0 %1413
        %1415 = vrot.lane.b32.xlu0 %v1284, 32
        %v1416 = vpop.permute.xlu0 %1415
        %1417 = vrot.lane.b32.xlu0 %v1313, 32
        %v1418 = vpop.permute.xlu0 %1417
        %1419 = vrot.lane.b32.xlu0 %v1314, 32
        %v1420 = vpop.permute.xlu0 %1419
        %1421 = vrot.lane.b32.xlu0 %v1315, 32
        %v1422 = vpop.permute.xlu0 %1421
        %1423 = vrot.lane.b32.xlu0 %v1316, 32
        %v1424 = vpop.permute.xlu0 %1423
        %1425 = vrot.lane.b32.xlu0 %v1345, 32
        %v1426 = vpop.permute.xlu0 %1425
        %1427 = vrot.lane.b32.xlu0 %v1346, 32
        %v1428 = vpop.permute.xlu0 %1427
        %1429 = vrot.lane.b32.xlu0 %v1347, 32
        %v1430 = vpop.permute.xlu0 %1429
        %1431 = vrot.lane.b32.xlu0 %v1348, 32
        %v1432 = vpop.permute.xlu0 %1431
        %1433 = vrot.lane.b32.xlu0 %v1377, 32
        %v1434 = vpop.permute.xlu0 %1433
        %1435 = vrot.lane.b32.xlu0 %v1378, 32
        %v1436 = vpop.permute.xlu0 %1435
        %1437 = vrot.lane.b32.xlu0 %v1379, 32
        %v1438 = vpop.permute.xlu0 %1437
        %1439 = vrot.lane.b32.xlu0 %v1380, 32
        %v1440 = vpop.permute.xlu0 %1439
        %v1457 = vsel %vm902, %v1089, %v1410
        %v1458 = vsel %vm902, %v1090, %v1412
        %v1459 = vsel %vm902, %v1091, %v1414
        %v1460 = vsel %vm902, %v1092, %v1416
        %v1461 = vsel %vm902, %v1121, %v1418
        %v1462 = vsel %vm902, %v1122, %v1420
        %v1463 = vsel %vm902, %v1123, %v1422
        %v1464 = vsel %vm902, %v1124, %v1424
        %v1465 = vsel %vm902, %v1153, %v1426
        %v1466 = vsel %vm902, %v1154, %v1428
        %v1467 = vsel %vm902, %v1155, %v1430
        %v1468 = vsel %vm902, %v1156, %v1432
        %v1469 = vsel %vm902, %v1185, %v1434
        %v1470 = vsel %vm902, %v1186, %v1436
        %v1471 = vsel %vm902, %v1187, %v1438
        %v1472 = vsel %vm902, %v1188, %v1440
        %v1473 = vpack.c.bf16 %v1458, %v1457
        %v1474 = vpack.c.bf16 %v1460, %v1459
        %v1475 = vpack.c.bf16 %v1462, %v1461
        %v1476 = vpack.c.bf16 %v1464, %v1463
        %v1477 = vpack.c.bf16 %v1466, %v1465
        %v1478 = vpack.c.bf16 %v1468, %v1467
        %v1479 = vpack.c.bf16 %v1470, %v1469
        %v1480 = vpack.c.bf16 %v1472, %v1471
        %v1482 = vsel %vm951, %v1473, 0
        %v1485 = vsel %vm951, %v1474, 0
        %v1488 = vsel %vm951, %v1475, 0
        %v1491 = vsel %vm951, %v1476, 0
        %v1494 = vsel %vm951, %v1477, 0
        %v1497 = vsel %vm951, %v1478, 0
        %v1500 = vsel %vm951, %v1479, 0
        %v1503 = vsel %vm951, %v1480, 0
        %1505 = vmatprep.subr.bf16.mxu0 0
        %1506 = vmatpush1.bf16.msra.mxu0 %v943
        %1507 = vmatprep.subr.bf16.mxu0 0
        %1508 = vmatpush1.bf16.msra.mxu0 %v944
        %1509 = vmatprep.subr.bf16.mxu0 0
        %1510 = vmatpush1.bf16.msra.mxu0 %v945
        %1511 = vmatprep.subr.bf16.mxu0 0
        %1512 = vmatpush1.bf16.msra.mxu0 %v946
        %1513 = vmatprep.subr.bf16.mxu0 0
        %1514 = vmatpush1.bf16.msra.mxu0 0
        %1515 = vmatprep.subr.bf16.mxu0 0
        %1516 = vmatpush1.bf16.msra.mxu0 0
        %1517 = vmatprep.subr.bf16.mxu0 0
        %1518 = vmatpush1.bf16.msra.mxu0 0
        %1519 = vmatprep.subr.bf16.mxu0 0
        %1520 = vmatpush1.bf16.msra.mxu0 0
        %1521 = vmatprep.subr.bf16.mxu0 0
        %1522 = vmatpush1.bf16.msra.mxu0 0
        %1523 = vmatprep.subr.bf16.mxu0 0
        %1524 = vmatpush1.bf16.msra.mxu0 0
        %1525 = vmatprep.subr.bf16.mxu0 0
        %1526 = vmatpush1.bf16.msra.mxu0 0
        %1527 = vmatprep.subr.bf16.mxu0 0
        %1528 = vmatpush1.bf16.msra.mxu0 0
        %1529 = vmatprep.subr.bf16.mxu0 0
        %1530 = vmatpush1.bf16.msra.mxu0 0
        %1531 = vmatprep.subr.bf16.mxu0 0
        %1532 = vmatpush1.bf16.msra.mxu0 0
        %1533 = vmatprep.subr.bf16.mxu0 0
        %1534 = vmatpush1.bf16.msra.mxu0 0
        %1535 = vmatprep.subr.bf16.mxu0 0
        %1536 = vmatpush1.bf16.msra.mxu0 0
        %1537 = vmatprep.mubr.bf16.mxu0 0
        %1538 = vmatmul.mubr.bf16.gmra.mrb[0].mxu0 %v1482
        %v1539 = vpop.f32.mrb[0].mxu0
        %v1540 = vadd.f32 0.0, %v1539
        %v1541 = vpop.f32.mrb[0].mxu0
        %v1542 = vpop.f32.mrb[0].mxu0
        %v1543 = vadd.f32 0.0, %v1542
        %v1544 = vpop.f32.mrb[0].mxu0
        %1545 = vmatprep.mubr.bf16.mxu0 0
        %1546 = vmatmul.mubr.bf16.gmra.mrb[0].mxu0 %v1485
        %v1547 = vpop.f32.mrb[0].mxu0
        %v1548 = vadd.f32 0.0, %v1547
        %v1549 = vpop.f32.mrb[0].mxu0
        %v1550 = vpop.f32.mrb[0].mxu0
        %v1551 = vadd.f32 0.0, %v1550
        %v1552 = vpop.f32.mrb[0].mxu0
        %1553 = vmatprep.mubr.bf16.mxu0 0
        %1554 = vmatmul.mubr.bf16.gmra.mrb[0].mxu0 %v1488
        %v1555 = vpop.f32.mrb[0].mxu0
        %v1556 = vadd.f32 0.0, %v1555
        %v1557 = vpop.f32.mrb[0].mxu0
        %v1558 = vpop.f32.mrb[0].mxu0
        %v1559 = vadd.f32 0.0, %v1558
        %v1560 = vpop.f32.mrb[0].mxu0
        %1561 = vmatprep.mubr.bf16.mxu0 0
        %1562 = vmatmul.mubr.bf16.gmra.mrb[0].mxu0 %v1491
        %v1563 = vpop.f32.mrb[0].mxu0
        %v1564 = vadd.f32 0.0, %v1563
        %v1565 = vpop.f32.mrb[0].mxu0
        %v1566 = vpop.f32.mrb[0].mxu0
        %v1567 = vadd.f32 0.0, %v1566
        %v1568 = vpop.f32.mrb[0].mxu0
        %1569 = vmatprep.mubr.bf16.mxu0 0
        %1570 = vmatmul.mubr.bf16.gmra.mrb[0].mxu0 %v1494
        %v1571 = vpop.f32.mrb[0].mxu0
        %v1572 = vadd.f32 0.0, %v1571
        %v1573 = vpop.f32.mrb[0].mxu0
        %v1574 = vpop.f32.mrb[0].mxu0
        %v1575 = vadd.f32 0.0, %v1574
        %v1576 = vpop.f32.mrb[0].mxu0
        %1577 = vmatprep.mubr.bf16.mxu0 0
        %1578 = vmatmul.mubr.bf16.gmra.mrb[0].mxu0 %v1497
        %v1579 = vpop.f32.mrb[0].mxu0
        %v1580 = vadd.f32 0.0, %v1579
        %v1581 = vpop.f32.mrb[0].mxu0
        %v1582 = vpop.f32.mrb[0].mxu0
        %v1583 = vadd.f32 0.0, %v1582
        %v1584 = vpop.f32.mrb[0].mxu0
        %1585 = vmatprep.mubr.bf16.mxu0 0
        %1586 = vmatmul.mubr.bf16.gmra.mrb[0].mxu0 %v1500
        %v1587 = vpop.f32.mrb[0].mxu0
        %v1588 = vadd.f32 0.0, %v1587
        %v1589 = vpop.f32.mrb[0].mxu0
        %v1590 = vpop.f32.mrb[0].mxu0
        %v1591 = vadd.f32 0.0, %v1590
        %v1592 = vpop.f32.mrb[0].mxu0
        %1593 = vmatprep.mubr.bf16.mxu0 0
        %1594 = vmatmul.mubr.bf16.gmra.mrb[0].mxu0 %v1503
        %v1595 = vpop.f32.mrb[0].mxu0
        %v1596 = vadd.f32 0.0, %v1595
        %v1597 = vpop.f32.mrb[0].mxu0
        %v1598 = vpop.f32.mrb[0].mxu0
        %v1599 = vadd.f32 0.0, %v1598
        %v1600 = vpop.f32.mrb[0].mxu0
        %1601 = vdwg.mxu0
        %v1602 = vld [vmem:[%s583] sm:$0xff]
        %v1603 = vld [vmem:[%s583 + $0x8] sm:$0xff]
        %v1604 = vld [vmem:[%s583 + $0x10] sm:$0xff]
        %v1605 = vld [vmem:[%s583 + $0x18] sm:$0xff]
        %v1606 = vmul.f32 %v1602, %v1540
        %v1607 = vmul.f32 %v1603, %v1543
        %v1608 = vmul.f32 %v1604, %v1548
        %v1609 = vmul.f32 %v1605, %v1551
        %v1610 = vmul.f32 %v1602, %v1556
        %v1611 = vmul.f32 %v1603, %v1559
        %v1612 = vmul.f32 %v1604, %v1564
        %v1613 = vmul.f32 %v1605, %v1567
        %v1614 = vmul.f32 %v1602, %v1572
        %v1615 = vmul.f32 %v1603, %v1575
        %v1616 = vmul.f32 %v1604, %v1580
        %v1617 = vmul.f32 %v1605, %v1583
        %v1618 = vmul.f32 %v1602, %v1588
        %v1619 = vmul.f32 %v1603, %v1591
        %v1620 = vmul.f32 %v1604, %v1596
        %v1621 = vmul.f32 %v1605, %v1599
        %v1622 = vld [vmem:[%s592] sm:$0xff]
        %v1623 = vld [vmem:[%s592 + $0x8] sm:$0xff]
        %v1624 = vld [vmem:[%s592 + $0x10] sm:$0xff]
        %v1625 = vld [vmem:[%s592 + $0x18] sm:$0xff]
        %v1626 = vld [vmem:[%s592 + $0x20] sm:$0xff]
        %v1627 = vld [vmem:[%s592 + $0x28] sm:$0xff]
        %v1628 = vld [vmem:[%s592 + $0x30] sm:$0xff]
        %v1629 = vld [vmem:[%s592 + $0x38] sm:$0xff]
        %v1630 = vld [vmem:[%s592 + $0x40] sm:$0xff]
        %v1631 = vld [vmem:[%s592 + $0x48] sm:$0xff]
        %v1632 = vld [vmem:[%s592 + $0x50] sm:$0xff]
        %v1633 = vld [vmem:[%s592 + $0x58] sm:$0xff]
        %v1634 = vld [vmem:[%s592 + $0x60] sm:$0xff]
        %v1635 = vld [vmem:[%s592 + $0x68] sm:$0xff]
        %v1636 = vld [vmem:[%s592 + $0x70] sm:$0xff]
        %v1637 = vld [vmem:[%s592 + $0x78] sm:$0xff]
        %v1638 = vsub.f32 %v1606, %v1622
        %v1639 = vsub.f32 %v1607, %v1623
        %v1640 = vsub.f32 %v1608, %v1624
        %v1641 = vsub.f32 %v1609, %v1625
        %v1642 = vsub.f32 %v1610, %v1626
        %v1643 = vsub.f32 %v1611, %v1627
        %v1644 = vsub.f32 %v1612, %v1628
        %v1645 = vsub.f32 %v1613, %v1629
        %v1646 = vsub.f32 %v1614, %v1630
        %v1647 = vsub.f32 %v1615, %v1631
        %v1648 = vsub.f32 %v1616, %v1632
        %v1649 = vsub.f32 %v1617, %v1633
        %v1650 = vsub.f32 %v1618, %v1634
        %v1651 = vsub.f32 %v1619, %v1635
        %v1652 = vsub.f32 %v1620, %v1636
        %v1653 = vsub.f32 %v1621, %v1637
        %1670 = vrot.lane.b32.xlu0 %v1540, 96
        %v1671 = vpop.permute.xlu0 %1670
        %1672 = vrot.lane.b32.xlu0 %v1543, 96
        %v1673 = vpop.permute.xlu0 %1672
        %1674 = vrot.lane.b32.xlu0 %v1548, 96
        %v1675 = vpop.permute.xlu0 %1674
        %1676 = vrot.lane.b32.xlu0 %v1551, 96
        %v1677 = vpop.permute.xlu0 %1676
        %1678 = vrot.lane.b32.xlu0 %v1556, 96
        %v1679 = vpop.permute.xlu0 %1678
        %1680 = vrot.lane.b32.xlu0 %v1559, 96
        %v1681 = vpop.permute.xlu0 %1680
        %1682 = vrot.lane.b32.xlu0 %v1564, 96
        %v1683 = vpop.permute.xlu0 %1682
        %1684 = vrot.lane.b32.xlu0 %v1567, 96
        %v1685 = vpop.permute.xlu0 %1684
        %1686 = vrot.lane.b32.xlu0 %v1572, 96
        %v1687 = vpop.permute.xlu0 %1686
        %1688 = vrot.lane.b32.xlu0 %v1575, 96
        %v1689 = vpop.permute.xlu0 %1688
        %1690 = vrot.lane.b32.xlu0 %v1580, 96
        %v1691 = vpop.permute.xlu0 %1690
        %1692 = vrot.lane.b32.xlu0 %v1583, 96
        %v1693 = vpop.permute.xlu0 %1692
        %1694 = vrot.lane.b32.xlu0 %v1588, 96
        %v1695 = vpop.permute.xlu0 %1694
        %1696 = vrot.lane.b32.xlu0 %v1591, 96
        %v1697 = vpop.permute.xlu0 %1696
        %1698 = vrot.lane.b32.xlu0 %v1596, 96
        %v1699 = vpop.permute.xlu0 %1698
        %1700 = vrot.lane.b32.xlu0 %v1599, 96
        %v1701 = vpop.permute.xlu0 %1700
        %v1718 = vmul.f32 %v1602, %v1671
        %v1719 = vmul.f32 %v1603, %v1673
        %v1720 = vmul.f32 %v1604, %v1675
        %v1721 = vmul.f32 %v1605, %v1677
        %v1722 = vmul.f32 %v1602, %v1679
        %v1723 = vmul.f32 %v1603, %v1681
        %v1724 = vmul.f32 %v1604, %v1683
        %v1725 = vmul.f32 %v1605, %v1685
        %v1726 = vmul.f32 %v1602, %v1687
        %v1727 = vmul.f32 %v1603, %v1689
        %v1728 = vmul.f32 %v1604, %v1691
        %v1729 = vmul.f32 %v1605, %v1693
        %v1730 = vmul.f32 %v1602, %v1695
        %v1731 = vmul.f32 %v1603, %v1697
        %v1732 = vmul.f32 %v1604, %v1699
        %v1733 = vmul.f32 %v1605, %v1701
        %v1734 = vld [vmem:[%s601] sm:$0xff]
        %v1735 = vld [vmem:[%s601 + $0x8] sm:$0xff]
        %v1736 = vld [vmem:[%s601 + $0x10] sm:$0xff]
        %v1737 = vld [vmem:[%s601 + $0x18] sm:$0xff]
        %v1738 = vld [vmem:[%s601 + $0x20] sm:$0xff]
        %v1739 = vld [vmem:[%s601 + $0x28] sm:$0xff]
        %v1740 = vld [vmem:[%s601 + $0x30] sm:$0xff]
        %v1741 = vld [vmem:[%s601 + $0x38] sm:$0xff]
        %v1742 = vld [vmem:[%s601 + $0x40] sm:$0xff]
        %v1743 = vld [vmem:[%s601 + $0x48] sm:$0xff]
        %v1744 = vld [vmem:[%s601 + $0x50] sm:$0xff]
        %v1745 = vld [vmem:[%s601 + $0x58] sm:$0xff]
        %v1746 = vld [vmem:[%s601 + $0x60] sm:$0xff]
        %v1747 = vld [vmem:[%s601 + $0x68] sm:$0xff]
        %v1748 = vld [vmem:[%s601 + $0x70] sm:$0xff]
        %v1749 = vld [vmem:[%s601 + $0x78] sm:$0xff]
        %v1750 = vsub.f32 %v1718, %v1734
        %v1751 = vsub.f32 %v1719, %v1735
        %v1752 = vsub.f32 %v1720, %v1736
        %v1753 = vsub.f32 %v1721, %v1737
        %v1754 = vsub.f32 %v1722, %v1738
        %v1755 = vsub.f32 %v1723, %v1739
        %v1756 = vsub.f32 %v1724, %v1740
        %v1757 = vsub.f32 %v1725, %v1741
        %v1758 = vsub.f32 %v1726, %v1742
        %v1759 = vsub.f32 %v1727, %v1743
        %v1760 = vsub.f32 %v1728, %v1744
        %v1761 = vsub.f32 %v1729, %v1745
        %v1762 = vsub.f32 %v1730, %v1746
        %v1763 = vsub.f32 %v1731, %v1747
        %v1764 = vsub.f32 %v1732, %v1748
        %v1765 = vsub.f32 %v1733, %v1749
        %1782 = vrot.lane.b32.xlu0 %v1750, 32
        %v1783 = vpop.permute.xlu0 %1782
        %1784 = vrot.lane.b32.xlu0 %v1751, 32
        %v1785 = vpop.permute.xlu0 %1784
        %1786 = vrot.lane.b32.xlu0 %v1752, 32
        %v1787 = vpop.permute.xlu0 %1786
        %1788 = vrot.lane.b32.xlu0 %v1753, 32
        %v1789 = vpop.permute.xlu0 %1788
        %1790 = vrot.lane.b32.xlu0 %v1754, 32
        %v1791 = vpop.permute.xlu0 %1790
        %1792 = vrot.lane.b32.xlu0 %v1755, 32
        %v1793 = vpop.permute.xlu0 %1792
        %1794 = vrot.lane.b32.xlu0 %v1756, 32
        %v1795 = vpop.permute.xlu0 %1794
        %1796 = vrot.lane.b32.xlu0 %v1757, 32
        %v1797 = vpop.permute.xlu0 %1796
        %1798 = vrot.lane.b32.xlu0 %v1758, 32
        %v1799 = vpop.permute.xlu0 %1798
        %1800 = vrot.lane.b32.xlu0 %v1759, 32
        %v1801 = vpop.permute.xlu0 %1800
        %1802 = vrot.lane.b32.xlu0 %v1760, 32
        %v1803 = vpop.permute.xlu0 %1802
        %1804 = vrot.lane.b32.xlu0 %v1761, 32
        %v1805 = vpop.permute.xlu0 %1804
        %1806 = vrot.lane.b32.xlu0 %v1762, 32
        %v1807 = vpop.permute.xlu0 %1806
        %1808 = vrot.lane.b32.xlu0 %v1763, 32
        %v1809 = vpop.permute.xlu0 %1808
        %1810 = vrot.lane.b32.xlu0 %v1764, 32
        %v1811 = vpop.permute.xlu0 %1810
        %1812 = vrot.lane.b32.xlu0 %v1765, 32
        %v1813 = vpop.permute.xlu0 %1812
        %v1830 = vsel %vm902, %v1638, %v1783
        %v1831 = vsel %vm902, %v1639, %v1785
        %v1832 = vsel %vm902, %v1640, %v1787
        %v1833 = vsel %vm902, %v1641, %v1789
        %v1834 = vsel %vm902, %v1642, %v1791
        %v1835 = vsel %vm902, %v1643, %v1793
        %v1836 = vsel %vm902, %v1644, %v1795
        %v1837 = vsel %vm902, %v1645, %v1797
        %v1838 = vsel %vm902, %v1646, %v1799
        %v1839 = vsel %vm902, %v1647, %v1801
        %v1840 = vsel %vm902, %v1648, %v1803
        %v1841 = vsel %vm902, %v1649, %v1805
        %v1842 = vsel %vm902, %v1650, %v1807
        %v1843 = vsel %vm902, %v1651, %v1809
        %v1844 = vsel %vm902, %v1652, %v1811
        %v1845 = vsel %vm902, %v1653, %v1813
        %v1846 = vpack.c.bf16 %v1831, %v1830
        %v1847 = vpack.c.bf16 %v1833, %v1832
        %v1848 = vpack.c.bf16 %v1835, %v1834
        %v1849 = vpack.c.bf16 %v1837, %v1836
        %v1850 = vpack.c.bf16 %v1839, %v1838
        %v1851 = vpack.c.bf16 %v1841, %v1840
        %v1852 = vpack.c.bf16 %v1843, %v1842
        %v1853 = vpack.c.bf16 %v1845, %v1844
        %v1862 = vunpack.c.l.b16 %v734
        %v1863 = vunpack.c.l.b16 %v735
        %v1864 = vunpack.c.l.b16 %v736
        %v1865 = vunpack.c.l.b16 %v737
        %v1866 = vunpack.c.l.b16 %v738
        %v1867 = vunpack.c.l.b16 %v739
        %v1868 = vunpack.c.l.b16 %v740
        %v1869 = vunpack.c.l.b16 %v741
        %v1870 = vpack.c.b16 %v1863, %v1862
        %v1871 = vpack.c.b16 %v1865, %v1864
        %v1872 = vpack.c.b16 %v1867, %v1866
        %v1873 = vpack.c.b16 %v1869, %v1868
        %v1879 = vsel %vm951, %v1846, 0
        %v1882 = vsel %vm951, %v1847, 0
        %v1885 = vsel %vm951, %v1848, 0
        %v1888 = vsel %vm951, %v1849, 0
        %v1891 = vsel %vm951, %v1850, 0
        %v1894 = vsel %vm951, %v1851, 0
        %v1897 = vsel %vm951, %v1852, 0
        %v1900 = vsel %vm951, %v1853, 0
        %1902 = vmatprep.subr.bf16.mxu0 0
        %1903 = vmatpush1.bf16.msra.mxu0 %v1870
        %1904 = vmatprep.subr.bf16.mxu0 0
        %1905 = vmatpush1.bf16.msra.mxu0 %v1871
        %1906 = vmatprep.subr.bf16.mxu0 0
        %1907 = vmatpush1.bf16.msra.mxu0 %v1872
        %1908 = vmatprep.subr.bf16.mxu0 0
        %1909 = vmatpush1.bf16.msra.mxu0 %v1873
        %1910 = vmatprep.subr.bf16.mxu0 0
        %1911 = vmatpush1.bf16.msra.mxu0 0
        %1912 = vmatprep.subr.bf16.mxu0 0
        %1913 = vmatpush1.bf16.msra.mxu0 0
        %1914 = vmatprep.subr.bf16.mxu0 0
        %1915 = vmatpush1.bf16.msra.mxu0 0
        %1916 = vmatprep.subr.bf16.mxu0 0
        %1917 = vmatpush1.bf16.msra.mxu0 0
        %1918 = vmatprep.subr.bf16.mxu0 0
        %1919 = vmatpush1.bf16.msra.mxu0 0
        %1920 = vmatprep.subr.bf16.mxu0 0
        %1921 = vmatpush1.bf16.msra.mxu0 0
        %1922 = vmatprep.subr.bf16.mxu0 0
        %1923 = vmatpush1.bf16.msra.mxu0 0
        %1924 = vmatprep.subr.bf16.mxu0 0
        %1925 = vmatpush1.bf16.msra.mxu0 0
        %1926 = vmatprep.subr.bf16.mxu0 0
        %1927 = vmatpush1.bf16.msra.mxu0 0
        %1928 = vmatprep.subr.bf16.mxu0 0
        %1929 = vmatpush1.bf16.msra.mxu0 0
        %1930 = vmatprep.subr.bf16.mxu0 0
        %1931 = vmatpush1.bf16.msra.mxu0 0
        %1932 = vmatprep.subr.bf16.mxu0 0
        %1933 = vmatpush1.bf16.msra.mxu0 0
        %1934 = vmatprep.mubr.bf16.mxu0 0
        %1935 = vmatmul.mubr.bf16.gmra.mrb[0].mxu0 %v1879
        %v1936 = vpop.f32.mrb[0].mxu0
        %v1937 = vadd.f32 0.0, %v1936
        %v1938 = vpop.f32.mrb[0].mxu0
        %v1939 = vpop.f32.mrb[0].mxu0
        %v1940 = vadd.f32 0.0, %v1939
        %v1941 = vpop.f32.mrb[0].mxu0
        %1942 = vmatprep.mubr.bf16.mxu0 0
        %1943 = vmatmul.mubr.bf16.gmra.mrb[0].mxu0 %v1882
        %v1944 = vpop.f32.mrb[0].mxu0
        %v1945 = vadd.f32 0.0, %v1944
        %v1946 = vpop.f32.mrb[0].mxu0
        %v1947 = vpop.f32.mrb[0].mxu0
        %v1948 = vadd.f32 0.0, %v1947
        %v1949 = vpop.f32.mrb[0].mxu0
        %1950 = vmatprep.mubr.bf16.mxu0 0
        %1951 = vmatmul.mubr.bf16.gmra.mrb[0].mxu0 %v1885
        %v1952 = vpop.f32.mrb[0].mxu0
        %v1953 = vadd.f32 0.0, %v1952
        %v1954 = vpop.f32.mrb[0].mxu0
        %v1955 = vpop.f32.mrb[0].mxu0
        %v1956 = vadd.f32 0.0, %v1955
        %v1957 = vpop.f32.mrb[0].mxu0
        %1958 = vmatprep.mubr.bf16.mxu0 0
        %1959 = vmatmul.mubr.bf16.gmra.mrb[0].mxu0 %v1888
        %v1960 = vpop.f32.mrb[0].mxu0
        %v1961 = vadd.f32 0.0, %v1960
        %v1962 = vpop.f32.mrb[0].mxu0
        %v1963 = vpop.f32.mrb[0].mxu0
        %v1964 = vadd.f32 0.0, %v1963
        %v1965 = vpop.f32.mrb[0].mxu0
        %1966 = vmatprep.mubr.bf16.mxu0 0
        %1967 = vmatmul.mubr.bf16.gmra.mrb[0].mxu0 %v1891
        %v1968 = vpop.f32.mrb[0].mxu0
        %v1969 = vadd.f32 0.0, %v1968
        %v1970 = vpop.f32.mrb[0].mxu0
        %v1971 = vpop.f32.mrb[0].mxu0
        %v1972 = vadd.f32 0.0, %v1971
        %v1973 = vpop.f32.mrb[0].mxu0
        %1974 = vmatprep.mubr.bf16.mxu0 0
        %1975 = vmatmul.mubr.bf16.gmra.mrb[0].mxu0 %v1894
        %v1976 = vpop.f32.mrb[0].mxu0
        %v1977 = vadd.f32 0.0, %v1976
        %v1978 = vpop.f32.mrb[0].mxu0
        %v1979 = vpop.f32.mrb[0].mxu0
        %v1980 = vadd.f32 0.0, %v1979
        %v1981 = vpop.f32.mrb[0].mxu0
        %1982 = vmatprep.mubr.bf16.mxu0 0
        %1983 = vmatmul.mubr.bf16.gmra.mrb[0].mxu0 %v1897
        %v1984 = vpop.f32.mrb[0].mxu0
        %v1985 = vadd.f32 0.0, %v1984
        %v1986 = vpop.f32.mrb[0].mxu0
        %v1987 = vpop.f32.mrb[0].mxu0
        %v1988 = vadd.f32 0.0, %v1987
        %v1989 = vpop.f32.mrb[0].mxu0
        %1990 = vmatprep.mubr.bf16.mxu0 0
        %1991 = vmatmul.mubr.bf16.gmra.mrb[0].mxu0 %v1900
        %v1992 = vpop.f32.mrb[0].mxu0
        %v1993 = vadd.f32 0.0, %v1992
        %v1994 = vpop.f32.mrb[0].mxu0
        %v1995 = vpop.f32.mrb[0].mxu0
        %v1996 = vadd.f32 0.0, %v1995
        %v1997 = vpop.f32.mrb[0].mxu0
        %1998 = vdwg.mxu0
        %1999 = vxpose.xlu0.b32.start [1/16] %v1937, 128
        %2000 = vxpose.xlu0.b32.cont [2/16] %v1940, 128
        %2001 = vxpose.xlu0.b32.cont [3/16] %v1945, 128
        %2002 = vxpose.xlu0.b32.cont [4/16] %v1948, 128
        %2003 = vxpose.xlu0.b32.cont [5/16] 0.0, 128
        %2004 = vxpose.xlu0.b32.cont [6/16] 0.0, 128
        %2005 = vxpose.xlu0.b32.cont [7/16] 0.0, 128
        %2006 = vxpose.xlu0.b32.cont [8/16] 0.0, 128
        %2007 = vxpose.xlu0.b32.cont [9/16] 0.0, 128
        %2008 = vxpose.xlu0.b32.cont [10/16] 0.0, 128
        %2009 = vxpose.xlu0.b32.cont [11/16] 0.0, 128
        %2010 = vxpose.xlu0.b32.cont [12/16] 0.0, 128
        %2011 = vxpose.xlu0.b32.cont [13/16] 0.0, 128
        %2012 = vxpose.xlu0.b32.cont [14/16] 0.0, 128
        %2013 = vxpose.xlu0.b32.cont [15/16] 0.0, 128
        %2014 = vxpose.xlu0.b32.end [16/16] 0.0, 128
        %v2015 = vpop.trf.xlu0
        %v2016 = vpop.trf.xlu0
        %v2017 = vpop.trf.xlu0
        %v2018 = vpop.trf.xlu0
        %v2019 = vpop.trf.xlu0
        %v2020 = vpop.trf.xlu0
        %v2021 = vpop.trf.xlu0
        %v2022 = vpop.trf.xlu0
        %v2023 = vpop.trf.xlu0
        %v2024 = vpop.trf.xlu0
        %v2025 = vpop.trf.xlu0
        %v2026 = vpop.trf.xlu0
        %v2027 = vpop.trf.xlu0
        %v2028 = vpop.trf.xlu0
        %v2029 = vpop.trf.xlu0
        %v2030 = vpop.trf.xlu0
        %2031 = vxpose.xlu0.b32.start [1/16] %v1953, 128
        %2032 = vxpose.xlu0.b32.cont [2/16] %v1956, 128
        %2033 = vxpose.xlu0.b32.cont [3/16] %v1961, 128
        %2034 = vxpose.xlu0.b32.cont [4/16] %v1964, 128
        %2035 = vxpose.xlu0.b32.cont [5/16] 0.0, 128
        %2036 = vxpose.xlu0.b32.cont [6/16] 0.0, 128
        %2037 = vxpose.xlu0.b32.cont [7/16] 0.0, 128
        %2038 = vxpose.xlu0.b32.cont [8/16] 0.0, 128
        %2039 = vxpose.xlu0.b32.cont [9/16] 0.0, 128
        %2040 = vxpose.xlu0.b32.cont [10/16] 0.0, 128
        %2041 = vxpose.xlu0.b32.cont [11/16] 0.0, 128
        %2042 = vxpose.xlu0.b32.cont [12/16] 0.0, 128
        %2043 = vxpose.xlu0.b32.cont [13/16] 0.0, 128
        %2044 = vxpose.xlu0.b32.cont [14/16] 0.0, 128
        %2045 = vxpose.xlu0.b32.cont [15/16] 0.0, 128
        %2046 = vxpose.xlu0.b32.end [16/16] 0.0, 128
        %v2047 = vpop.trf.xlu0
        %v2048 = vpop.trf.xlu0
        %v2049 = vpop.trf.xlu0
        %v2050 = vpop.trf.xlu0
        %v2051 = vpop.trf.xlu0
        %v2052 = vpop.trf.xlu0
        %v2053 = vpop.trf.xlu0
        %v2054 = vpop.trf.xlu0
        %v2055 = vpop.trf.xlu0
        %v2056 = vpop.trf.xlu0
        %v2057 = vpop.trf.xlu0
        %v2058 = vpop.trf.xlu0
        %v2059 = vpop.trf.xlu0
        %v2060 = vpop.trf.xlu0
        %v2061 = vpop.trf.xlu0
        %v2062 = vpop.trf.xlu0
        %2063 = vxpose.xlu0.b32.start [1/16] %v1969, 128
        %2064 = vxpose.xlu0.b32.cont [2/16] %v1972, 128
        %2065 = vxpose.xlu0.b32.cont [3/16] %v1977, 128
        %2066 = vxpose.xlu0.b32.cont [4/16] %v1980, 128
        %2067 = vxpose.xlu0.b32.cont [5/16] 0.0, 128
        %2068 = vxpose.xlu0.b32.cont [6/16] 0.0, 128
        %2069 = vxpose.xlu0.b32.cont [7/16] 0.0, 128
        %2070 = vxpose.xlu0.b32.cont [8/16] 0.0, 128
        %2071 = vxpose.xlu0.b32.cont [9/16] 0.0, 128
        %2072 = vxpose.xlu0.b32.cont [10/16] 0.0, 128
        %2073 = vxpose.xlu0.b32.cont [11/16] 0.0, 128
        %2074 = vxpose.xlu0.b32.cont [12/16] 0.0, 128
        %2075 = vxpose.xlu0.b32.cont [13/16] 0.0, 128
        %2076 = vxpose.xlu0.b32.cont [14/16] 0.0, 128
        %2077 = vxpose.xlu0.b32.cont [15/16] 0.0, 128
        %2078 = vxpose.xlu0.b32.end [16/16] 0.0, 128
        %v2079 = vpop.trf.xlu0
        %v2080 = vpop.trf.xlu0
        %v2081 = vpop.trf.xlu0
        %v2082 = vpop.trf.xlu0
        %v2083 = vpop.trf.xlu0
        %v2084 = vpop.trf.xlu0
        %v2085 = vpop.trf.xlu0
        %v2086 = vpop.trf.xlu0
        %v2087 = vpop.trf.xlu0
        %v2088 = vpop.trf.xlu0
        %v2089 = vpop.trf.xlu0
        %v2090 = vpop.trf.xlu0
        %v2091 = vpop.trf.xlu0
        %v2092 = vpop.trf.xlu0
        %v2093 = vpop.trf.xlu0
        %v2094 = vpop.trf.xlu0
        %2095 = vxpose.xlu0.b32.start [1/16] %v1985, 128
        %2096 = vxpose.xlu0.b32.cont [2/16] %v1988, 128
        %2097 = vxpose.xlu0.b32.cont [3/16] %v1993, 128
        %2098 = vxpose.xlu0.b32.cont [4/16] %v1996, 128
        %2099 = vxpose.xlu0.b32.cont [5/16] 0.0, 128
        %2100 = vxpose.xlu0.b32.cont [6/16] 0.0, 128
        %2101 = vxpose.xlu0.b32.cont [7/16] 0.0, 128
        %2102 = vxpose.xlu0.b32.cont [8/16] 0.0, 128
        %2103 = vxpose.xlu0.b32.cont [9/16] 0.0, 128
        %2104 = vxpose.xlu0.b32.cont [10/16] 0.0, 128
        %2105 = vxpose.xlu0.b32.cont [11/16] 0.0, 128
        %2106 = vxpose.xlu0.b32.cont [12/16] 0.0, 128
        %2107 = vxpose.xlu0.b32.cont [13/16] 0.0, 128
        %2108 = vxpose.xlu0.b32.cont [14/16] 0.0, 128
        %2109 = vxpose.xlu0.b32.cont [15/16] 0.0, 128
        %2110 = vxpose.xlu0.b32.end [16/16] 0.0, 128
        %v2111 = vpop.trf.xlu0
        %v2112 = vpop.trf.xlu0
        %v2113 = vpop.trf.xlu0
        %v2114 = vpop.trf.xlu0
        %v2115 = vpop.trf.xlu0
        %v2116 = vpop.trf.xlu0
        %v2117 = vpop.trf.xlu0
        %v2118 = vpop.trf.xlu0
        %v2119 = vpop.trf.xlu0
        %v2120 = vpop.trf.xlu0
        %v2121 = vpop.trf.xlu0
        %v2122 = vpop.trf.xlu0
        %v2123 = vpop.trf.xlu0
        %v2124 = vpop.trf.xlu0
        %v2125 = vpop.trf.xlu0
        %v2126 = vpop.trf.xlu0
        %2143 = vrot.lane.b32.xlu0 %v1937, 96
        %v2144 = vpop.permute.xlu0 %2143
        %2145 = vrot.lane.b32.xlu0 %v1940, 96
        %v2146 = vpop.permute.xlu0 %2145
        %2147 = vrot.lane.b32.xlu0 %v1945, 96
        %v2148 = vpop.permute.xlu0 %2147
        %2149 = vrot.lane.b32.xlu0 %v1948, 96
        %v2150 = vpop.permute.xlu0 %2149
        %2151 = vrot.lane.b32.xlu0 %v1953, 96
        %v2152 = vpop.permute.xlu0 %2151
        %2153 = vrot.lane.b32.xlu0 %v1956, 96
        %v2154 = vpop.permute.xlu0 %2153
        %2155 = vrot.lane.b32.xlu0 %v1961, 96
        %v2156 = vpop.permute.xlu0 %2155
        %2157 = vrot.lane.b32.xlu0 %v1964, 96
        %v2158 = vpop.permute.xlu0 %2157
        %2159 = vrot.lane.b32.xlu0 %v1969, 96
        %v2160 = vpop.permute.xlu0 %2159
        %2161 = vrot.lane.b32.xlu0 %v1972, 96
        %v2162 = vpop.permute.xlu0 %2161
        %2163 = vrot.lane.b32.xlu0 %v1977, 96
        %v2164 = vpop.permute.xlu0 %2163
        %2165 = vrot.lane.b32.xlu0 %v1980, 96
        %v2166 = vpop.permute.xlu0 %2165
        %2167 = vrot.lane.b32.xlu0 %v1985, 96
        %v2168 = vpop.permute.xlu0 %2167
        %2169 = vrot.lane.b32.xlu0 %v1988, 96
        %v2170 = vpop.permute.xlu0 %2169
        %2171 = vrot.lane.b32.xlu0 %v1993, 96
        %v2172 = vpop.permute.xlu0 %2171
        %2173 = vrot.lane.b32.xlu0 %v1996, 96
        %v2174 = vpop.permute.xlu0 %2173
        %2191 = vxpose.xlu0.b32.start [1/16] %v2144, 128
        %2192 = vxpose.xlu0.b32.cont [2/16] %v2146, 128
        %2193 = vxpose.xlu0.b32.cont [3/16] %v2148, 128
        %2194 = vxpose.xlu0.b32.cont [4/16] %v2150, 128
        %2195 = vxpose.xlu0.b32.cont [5/16] 0.0, 128
        %2196 = vxpose.xlu0.b32.cont [6/16] 0.0, 128
        %2197 = vxpose.xlu0.b32.cont [7/16] 0.0, 128
        %2198 = vxpose.xlu0.b32.cont [8/16] 0.0, 128
        %2199 = vxpose.xlu0.b32.cont [9/16] 0.0, 128
        %2200 = vxpose.xlu0.b32.cont [10/16] 0.0, 128
        %2201 = vxpose.xlu0.b32.cont [11/16] 0.0, 128
        %2202 = vxpose.xlu0.b32.cont [12/16] 0.0, 128
        %2203 = vxpose.xlu0.b32.cont [13/16] 0.0, 128
        %2204 = vxpose.xlu0.b32.cont [14/16] 0.0, 128
        %2205 = vxpose.xlu0.b32.cont [15/16] 0.0, 128
        %2206 = vxpose.xlu0.b32.end [16/16] 0.0, 128
        %v2207 = vpop.trf.xlu0
        %v2208 = vpop.trf.xlu0
        %v2209 = vpop.trf.xlu0
        %v2210 = vpop.trf.xlu0
        %v2211 = vpop.trf.xlu0
        %v2212 = vpop.trf.xlu0
        %v2213 = vpop.trf.xlu0
        %v2214 = vpop.trf.xlu0
        %v2215 = vpop.trf.xlu0
        %v2216 = vpop.trf.xlu0
        %v2217 = vpop.trf.xlu0
        %v2218 = vpop.trf.xlu0
        %v2219 = vpop.trf.xlu0
        %v2220 = vpop.trf.xlu0
        %v2221 = vpop.trf.xlu0
        %v2222 = vpop.trf.xlu0
        %2223 = vxpose.xlu0.b32.start [1/16] %v2152, 128
        %2224 = vxpose.xlu0.b32.cont [2/16] %v2154, 128
        %2225 = vxpose.xlu0.b32.cont [3/16] %v2156, 128
        %2226 = vxpose.xlu0.b32.cont [4/16] %v2158, 128
        %2227 = vxpose.xlu0.b32.cont [5/16] 0.0, 128
        %2228 = vxpose.xlu0.b32.cont [6/16] 0.0, 128
        %2229 = vxpose.xlu0.b32.cont [7/16] 0.0, 128
        %2230 = vxpose.xlu0.b32.cont [8/16] 0.0, 128
        %2231 = vxpose.xlu0.b32.cont [9/16] 0.0, 128
        %2232 = vxpose.xlu0.b32.cont [10/16] 0.0, 128
        %2233 = vxpose.xlu0.b32.cont [11/16] 0.0, 128
        %2234 = vxpose.xlu0.b32.cont [12/16] 0.0, 128
        %2235 = vxpose.xlu0.b32.cont [13/16] 0.0, 128
        %2236 = vxpose.xlu0.b32.cont [14/16] 0.0, 128
        %2237 = vxpose.xlu0.b32.cont [15/16] 0.0, 128
        %2238 = vxpose.xlu0.b32.end [16/16] 0.0, 128
        %v2239 = vpop.trf.xlu0
        %v2240 = vpop.trf.xlu0
        %v2241 = vpop.trf.xlu0
        %v2242 = vpop.trf.xlu0
        %v2243 = vpop.trf.xlu0
        %v2244 = vpop.trf.xlu0
        %v2245 = vpop.trf.xlu0
        %v2246 = vpop.trf.xlu0
        %v2247 = vpop.trf.xlu0
        %v2248 = vpop.trf.xlu0
        %v2249 = vpop.trf.xlu0
        %v2250 = vpop.trf.xlu0
        %v2251 = vpop.trf.xlu0
        %v2252 = vpop.trf.xlu0
        %v2253 = vpop.trf.xlu0
        %v2254 = vpop.trf.xlu0
        %2255 = vxpose.xlu0.b32.start [1/16] %v2160, 128
        %2256 = vxpose.xlu0.b32.cont [2/16] %v2162, 128
        %2257 = vxpose.xlu0.b32.cont [3/16] %v2164, 128
        %2258 = vxpose.xlu0.b32.cont [4/16] %v2166, 128
        %2259 = vxpose.xlu0.b32.cont [5/16] 0.0, 128
        %2260 = vxpose.xlu0.b32.cont [6/16] 0.0, 128
        %2261 = vxpose.xlu0.b32.cont [7/16] 0.0, 128
        %2262 = vxpose.xlu0.b32.cont [8/16] 0.0, 128
        %2263 = vxpose.xlu0.b32.cont [9/16] 0.0, 128
        %2264 = vxpose.xlu0.b32.cont [10/16] 0.0, 128
        %2265 = vxpose.xlu0.b32.cont [11/16] 0.0, 128
        %2266 = vxpose.xlu0.b32.cont [12/16] 0.0, 128
        %2267 = vxpose.xlu0.b32.cont [13/16] 0.0, 128
        %2268 = vxpose.xlu0.b32.cont [14/16] 0.0, 128
        %2269 = vxpose.xlu0.b32.cont [15/16] 0.0, 128
        %2270 = vxpose.xlu0.b32.end [16/16] 0.0, 128
        %v2271 = vpop.trf.xlu0
        %v2272 = vpop.trf.xlu0
        %v2273 = vpop.trf.xlu0
        %v2274 = vpop.trf.xlu0
        %v2275 = vpop.trf.xlu0
        %v2276 = vpop.trf.xlu0
        %v2277 = vpop.trf.xlu0
        %v2278 = vpop.trf.xlu0
        %v2279 = vpop.trf.xlu0
        %v2280 = vpop.trf.xlu0
        %v2281 = vpop.trf.xlu0
        %v2282 = vpop.trf.xlu0
        %v2283 = vpop.trf.xlu0
        %v2284 = vpop.trf.xlu0
        %v2285 = vpop.trf.xlu0
        %v2286 = vpop.trf.xlu0
        %2287 = vxpose.xlu0.b32.start [1/16] %v2168, 128
        %2288 = vxpose.xlu0.b32.cont [2/16] %v2170, 128
        %2289 = vxpose.xlu0.b32.cont [3/16] %v2172, 128
        %2290 = vxpose.xlu0.b32.cont [4/16] %v2174, 128
        %2291 = vxpose.xlu0.b32.cont [5/16] 0.0, 128
        %2292 = vxpose.xlu0.b32.cont [6/16] 0.0, 128
        %2293 = vxpose.xlu0.b32.cont [7/16] 0.0, 128
        %2294 = vxpose.xlu0.b32.cont [8/16] 0.0, 128
        %2295 = vxpose.xlu0.b32.cont [9/16] 0.0, 128
        %2296 = vxpose.xlu0.b32.cont [10/16] 0.0, 128
        %2297 = vxpose.xlu0.b32.cont [11/16] 0.0, 128
        %2298 = vxpose.xlu0.b32.cont [12/16] 0.0, 128
        %2299 = vxpose.xlu0.b32.cont [13/16] 0.0, 128
        %2300 = vxpose.xlu0.b32.cont [14/16] 0.0, 128
        %2301 = vxpose.xlu0.b32.cont [15/16] 0.0, 128
        %2302 = vxpose.xlu0.b32.end [16/16] 0.0, 128
        %v2303 = vpop.trf.xlu0
        %v2304 = vpop.trf.xlu0
        %v2305 = vpop.trf.xlu0
        %v2306 = vpop.trf.xlu0
        %v2307 = vpop.trf.xlu0
        %v2308 = vpop.trf.xlu0
        %v2309 = vpop.trf.xlu0
        %v2310 = vpop.trf.xlu0
        %v2311 = vpop.trf.xlu0
        %v2312 = vpop.trf.xlu0
        %v2313 = vpop.trf.xlu0
        %v2314 = vpop.trf.xlu0
        %v2315 = vpop.trf.xlu0
        %v2316 = vpop.trf.xlu0
        %v2317 = vpop.trf.xlu0
        %v2318 = vpop.trf.xlu0
        %2335 = vrot.lane.b32.xlu0 %v2207, 32
        %v2336 = vpop.permute.xlu0 %2335
        %2337 = vrot.lane.b32.xlu0 %v2208, 32
        %v2338 = vpop.permute.xlu0 %2337
        %2339 = vrot.lane.b32.xlu0 %v2209, 32
        %v2340 = vpop.permute.xlu0 %2339
        %2341 = vrot.lane.b32.xlu0 %v2210, 32
        %v2342 = vpop.permute.xlu0 %2341
        %2343 = vrot.lane.b32.xlu0 %v2239, 32
        %v2344 = vpop.permute.xlu0 %2343
        %2345 = vrot.lane.b32.xlu0 %v2240, 32
        %v2346 = vpop.permute.xlu0 %2345
        %2347 = vrot.lane.b32.xlu0 %v2241, 32
        %v2348 = vpop.permute.xlu0 %2347
        %2349 = vrot.lane.b32.xlu0 %v2242, 32
        %v2350 = vpop.permute.xlu0 %2349
        %2351 = vrot.lane.b32.xlu0 %v2271, 32
        %v2352 = vpop.permute.xlu0 %2351
        %2353 = vrot.lane.b32.xlu0 %v2272, 32
        %v2354 = vpop.permute.xlu0 %2353
        %2355 = vrot.lane.b32.xlu0 %v2273, 32
        %v2356 = vpop.permute.xlu0 %2355
        %2357 = vrot.lane.b32.xlu0 %v2274, 32
        %v2358 = vpop.permute.xlu0 %2357
        %2359 = vrot.lane.b32.xlu0 %v2303, 32
        %v2360 = vpop.permute.xlu0 %2359
        %2361 = vrot.lane.b32.xlu0 %v2304, 32
        %v2362 = vpop.permute.xlu0 %2361
        %2363 = vrot.lane.b32.xlu0 %v2305, 32
        %v2364 = vpop.permute.xlu0 %2363
        %2365 = vrot.lane.b32.xlu0 %v2306, 32
        %v2366 = vpop.permute.xlu0 %2365
        %v2383 = vsel %vm902, %v2015, %v2336
        %v2384 = vsel %vm902, %v2016, %v2338
        %v2385 = vsel %vm902, %v2017, %v2340
        %v2386 = vsel %vm902, %v2018, %v2342
        %v2387 = vsel %vm902, %v2047, %v2344
        %v2388 = vsel %vm902, %v2048, %v2346
        %v2389 = vsel %vm902, %v2049, %v2348
        %v2390 = vsel %vm902, %v2050, %v2350
        %v2391 = vsel %vm902, %v2079, %v2352
        %v2392 = vsel %vm902, %v2080, %v2354
        %v2393 = vsel %vm902, %v2081, %v2356
        %v2394 = vsel %vm902, %v2082, %v2358
        %v2395 = vsel %vm902, %v2111, %v2360
        %v2396 = vsel %vm902, %v2112, %v2362
        %v2397 = vsel %vm902, %v2113, %v2364
        %v2398 = vsel %vm902, %v2114, %v2366
        %v2399 = vpack.c.bf16 %v2384, %v2383
        %v2400 = vpack.c.bf16 %v2386, %v2385
        %v2401 = vpack.c.bf16 %v2388, %v2387
        %v2402 = vpack.c.bf16 %v2390, %v2389
        %v2403 = vpack.c.bf16 %v2392, %v2391
        %v2404 = vpack.c.bf16 %v2394, %v2393
        %v2405 = vpack.c.bf16 %v2396, %v2395
        %v2406 = vpack.c.bf16 %v2398, %v2397
        %v2408 = vsel %vm951, %v2399, 0
        %v2411 = vsel %vm951, %v2400, 0
        %v2414 = vsel %vm951, %v2401, 0
        %v2417 = vsel %vm951, %v2402, 0
        %v2420 = vsel %vm951, %v2403, 0
        %v2423 = vsel %vm951, %v2404, 0
        %v2426 = vsel %vm951, %v2405, 0
        %v2429 = vsel %vm951, %v2406, 0
        %2431 = vmatprep.subr.bf16.mxu0 0
        %2432 = vmatpush1.bf16.msra.mxu0 %v1870
        %2433 = vmatprep.subr.bf16.mxu0 0
        %2434 = vmatpush1.bf16.msra.mxu0 %v1871
        %2435 = vmatprep.subr.bf16.mxu0 0
        %2436 = vmatpush1.bf16.msra.mxu0 %v1872
        %2437 = vmatprep.subr.bf16.mxu0 0
        %2438 = vmatpush1.bf16.msra.mxu0 %v1873
        %2439 = vmatprep.subr.bf16.mxu0 0
        %2440 = vmatpush1.bf16.msra.mxu0 0
        %2441 = vmatprep.subr.bf16.mxu0 0
        %2442 = vmatpush1.bf16.msra.mxu0 0
        %2443 = vmatprep.subr.bf16.mxu0 0
        %2444 = vmatpush1.bf16.msra.mxu0 0
        %2445 = vmatprep.subr.bf16.mxu0 0
        %2446 = vmatpush1.bf16.msra.mxu0 0
        %2447 = vmatprep.subr.bf16.mxu0 0
        %2448 = vmatpush1.bf16.msra.mxu0 0
        %2449 = vmatprep.subr.bf16.mxu0 0
        %2450 = vmatpush1.bf16.msra.mxu0 0
        %2451 = vmatprep.subr.bf16.mxu0 0
        %2452 = vmatpush1.bf16.msra.mxu0 0
        %2453 = vmatprep.subr.bf16.mxu0 0
        %2454 = vmatpush1.bf16.msra.mxu0 0
        %2455 = vmatprep.subr.bf16.mxu0 0
        %2456 = vmatpush1.bf16.msra.mxu0 0
        %2457 = vmatprep.subr.bf16.mxu0 0
        %2458 = vmatpush1.bf16.msra.mxu0 0
        %2459 = vmatprep.subr.bf16.mxu0 0
        %2460 = vmatpush1.bf16.msra.mxu0 0
        %2461 = vmatprep.subr.bf16.mxu0 0
        %2462 = vmatpush1.bf16.msra.mxu0 0
        %2463 = vmatprep.mubr.bf16.mxu0 0
        %2464 = vmatmul.mubr.bf16.gmra.mrb[0].mxu0 %v2408
        %v2465 = vpop.f32.mrb[0].mxu0
        %v2466 = vadd.f32 0.0, %v2465
        %v2467 = vpop.f32.mrb[0].mxu0
        %v2468 = vpop.f32.mrb[0].mxu0
        %v2469 = vadd.f32 0.0, %v2468
        %v2470 = vpop.f32.mrb[0].mxu0
        %2471 = vmatprep.mubr.bf16.mxu0 0
        %2472 = vmatmul.mubr.bf16.gmra.mrb[0].mxu0 %v2411
        %v2473 = vpop.f32.mrb[0].mxu0
        %v2474 = vadd.f32 0.0, %v2473
        %v2475 = vpop.f32.mrb[0].mxu0
        %v2476 = vpop.f32.mrb[0].mxu0
        %v2477 = vadd.f32 0.0, %v2476
        %v2478 = vpop.f32.mrb[0].mxu0
        %2479 = vmatprep.mubr.bf16.mxu0 0
        %2480 = vmatmul.mubr.bf16.gmra.mrb[0].mxu0 %v2414
        %v2481 = vpop.f32.mrb[0].mxu0
        %v2482 = vadd.f32 0.0, %v2481
        %v2483 = vpop.f32.mrb[0].mxu0
        %v2484 = vpop.f32.mrb[0].mxu0
        %v2485 = vadd.f32 0.0, %v2484
        %v2486 = vpop.f32.mrb[0].mxu0
        %2487 = vmatprep.mubr.bf16.mxu0 0
        %2488 = vmatmul.mubr.bf16.gmra.mrb[0].mxu0 %v2417
        %v2489 = vpop.f32.mrb[0].mxu0
        %v2490 = vadd.f32 0.0, %v2489
        %v2491 = vpop.f32.mrb[0].mxu0
        %v2492 = vpop.f32.mrb[0].mxu0
        %v2493 = vadd.f32 0.0, %v2492
        %v2494 = vpop.f32.mrb[0].mxu0
        %2495 = vmatprep.mubr.bf16.mxu0 0
        %2496 = vmatmul.mubr.bf16.gmra.mrb[0].mxu0 %v2420
        %v2497 = vpop.f32.mrb[0].mxu0
        %v2498 = vadd.f32 0.0, %v2497
        %v2499 = vpop.f32.mrb[0].mxu0
        %v2500 = vpop.f32.mrb[0].mxu0
        %v2501 = vadd.f32 0.0, %v2500
        %v2502 = vpop.f32.mrb[0].mxu0
        %2503 = vmatprep.mubr.bf16.mxu0 0
        %2504 = vmatmul.mubr.bf16.gmra.mrb[0].mxu0 %v2423
        %v2505 = vpop.f32.mrb[0].mxu0
        %v2506 = vadd.f32 0.0, %v2505
        %v2507 = vpop.f32.mrb[0].mxu0
        %v2508 = vpop.f32.mrb[0].mxu0
        %v2509 = vadd.f32 0.0, %v2508
        %v2510 = vpop.f32.mrb[0].mxu0
        %2511 = vmatprep.mubr.bf16.mxu0 0
        %2512 = vmatmul.mubr.bf16.gmra.mrb[0].mxu0 %v2426
        %v2513 = vpop.f32.mrb[0].mxu0
        %v2514 = vadd.f32 0.0, %v2513
        %v2515 = vpop.f32.mrb[0].mxu0
        %v2516 = vpop.f32.mrb[0].mxu0
        %v2517 = vadd.f32 0.0, %v2516
        %v2518 = vpop.f32.mrb[0].mxu0
        %2519 = vmatprep.mubr.bf16.mxu0 0
        %2520 = vmatmul.mubr.bf16.gmra.mrb[0].mxu0 %v2429
        %v2521 = vpop.f32.mrb[0].mxu0
        %v2522 = vadd.f32 0.0, %v2521
        %v2523 = vpop.f32.mrb[0].mxu0
        %v2524 = vpop.f32.mrb[0].mxu0
        %v2525 = vadd.f32 0.0, %v2524
        %v2526 = vpop.f32.mrb[0].mxu0
        %2527 = vdwg.mxu0
        %v2528 = vmul.f32 %v694, %v2466
        %v2529 = vmul.f32 %v695, %v2469
        %v2530 = vmul.f32 %v696, %v2474
        %v2531 = vmul.f32 %v697, %v2477
        %v2532 = vmul.f32 %v698, %v2482
        %v2533 = vmul.f32 %v699, %v2485
        %v2534 = vmul.f32 %v700, %v2490
        %v2535 = vmul.f32 %v701, %v2493
        %v2536 = vmul.f32 %v702, %v2498
        %v2537 = vmul.f32 %v703, %v2501
        %v2538 = vmul.f32 %v704, %v2506
        %v2539 = vmul.f32 %v705, %v2509
        %v2540 = vmul.f32 %v706, %v2514
        %v2541 = vmul.f32 %v707, %v2517
        %v2542 = vmul.f32 %v708, %v2522
        %v2543 = vmul.f32 %v709, %v2525
        %2560 = vrot.lane.b32.xlu0 %v2466, 96
        %v2561 = vpop.permute.xlu0 %2560
        %2562 = vrot.lane.b32.xlu0 %v2469, 96
        %v2563 = vpop.permute.xlu0 %2562
        %2564 = vrot.lane.b32.xlu0 %v2474, 96
        %v2565 = vpop.permute.xlu0 %2564
        %2566 = vrot.lane.b32.xlu0 %v2477, 96
        %v2567 = vpop.permute.xlu0 %2566
        %2568 = vrot.lane.b32.xlu0 %v2482, 96
        %v2569 = vpop.permute.xlu0 %2568
        %2570 = vrot.lane.b32.xlu0 %v2485, 96
        %v2571 = vpop.permute.xlu0 %2570
        %2572 = vrot.lane.b32.xlu0 %v2490, 96
        %v2573 = vpop.permute.xlu0 %2572
        %2574 = vrot.lane.b32.xlu0 %v2493, 96
        %v2575 = vpop.permute.xlu0 %2574
        %2576 = vrot.lane.b32.xlu0 %v2498, 96
        %v2577 = vpop.permute.xlu0 %2576
        %2578 = vrot.lane.b32.xlu0 %v2501, 96
        %v2579 = vpop.permute.xlu0 %2578
        %2580 = vrot.lane.b32.xlu0 %v2506, 96
        %v2581 = vpop.permute.xlu0 %2580
        %2582 = vrot.lane.b32.xlu0 %v2509, 96
        %v2583 = vpop.permute.xlu0 %2582
        %2584 = vrot.lane.b32.xlu0 %v2514, 96
        %v2585 = vpop.permute.xlu0 %2584
        %2586 = vrot.lane.b32.xlu0 %v2517, 96
        %v2587 = vpop.permute.xlu0 %2586
        %2588 = vrot.lane.b32.xlu0 %v2522, 96
        %v2589 = vpop.permute.xlu0 %2588
        %2590 = vrot.lane.b32.xlu0 %v2525, 96
        %v2591 = vpop.permute.xlu0 %2590
        %v2608 = vmul.f32 %v710, %v2561
        %v2609 = vmul.f32 %v711, %v2563
        %v2610 = vmul.f32 %v712, %v2565
        %v2611 = vmul.f32 %v713, %v2567
        %v2612 = vmul.f32 %v714, %v2569
        %v2613 = vmul.f32 %v715, %v2571
        %v2614 = vmul.f32 %v716, %v2573
        %v2615 = vmul.f32 %v717, %v2575
        %v2616 = vmul.f32 %v718, %v2577
        %v2617 = vmul.f32 %v719, %v2579
        %v2618 = vmul.f32 %v720, %v2581
        %v2619 = vmul.f32 %v721, %v2583
        %v2620 = vmul.f32 %v722, %v2585
        %v2621 = vmul.f32 %v723, %v2587
        %v2622 = vmul.f32 %v724, %v2589
        %v2623 = vmul.f32 %v725, %v2591
        %v2624 = vadd.f32 %v2528, %v2608
        %v2625 = vadd.f32 %v2529, %v2609
        %v2626 = vadd.f32 %v2530, %v2610
        %v2627 = vadd.f32 %v2531, %v2611
        %v2628 = vadd.f32 %v2532, %v2612
        %v2629 = vadd.f32 %v2533, %v2613
        %v2630 = vadd.f32 %v2534, %v2614
        %v2631 = vadd.f32 %v2535, %v2615
        %v2632 = vadd.f32 %v2536, %v2616
        %v2633 = vadd.f32 %v2537, %v2617
        %v2634 = vadd.f32 %v2538, %v2618
        %v2635 = vadd.f32 %v2539, %v2619
        %v2636 = vadd.f32 %v2540, %v2620
        %v2637 = vadd.f32 %v2541, %v2621
        %v2638 = vadd.f32 %v2542, %v2622
        %v2639 = vadd.f32 %v2543, %v2623
        %v2640 = vsel %vm902, %v2624, 0.0
        %v2641 = vsel %vm902, %v2628, 0.0
        %v2642 = vadd.f32 %v2640, %v2641
        %v2643 = vsel %vm902, %v2632, 0.0
        %v2644 = vadd.f32 %v2642, %v2643
        %v2645 = vsel %vm902, %v2636, 0.0
        %v2646 = vadd.f32 %v2644, %v2645
        %v2647 = vsel %vm902, %v2625, 0.0
        %v2648 = vsel %vm902, %v2629, 0.0
        %v2649 = vadd.f32 %v2647, %v2648
        %v2650 = vsel %vm902, %v2633, 0.0
        %v2651 = vadd.f32 %v2649, %v2650
        %v2652 = vsel %vm902, %v2637, 0.0
        %v2653 = vadd.f32 %v2651, %v2652
        %v2654 = vsel %vm902, %v2626, 0.0
        %v2655 = vsel %vm902, %v2630, 0.0
        %v2656 = vadd.f32 %v2654, %v2655
        %v2657 = vsel %vm902, %v2634, 0.0
        %v2658 = vadd.f32 %v2656, %v2657
        %v2659 = vsel %vm902, %v2638, 0.0
        %v2660 = vadd.f32 %v2658, %v2659
        %v2661 = vsel %vm902, %v2627, 0.0
        %v2662 = vsel %vm902, %v2631, 0.0
        %v2663 = vadd.f32 %v2661, %v2662
        %v2664 = vsel %vm902, %v2635, 0.0
        %v2665 = vadd.f32 %v2663, %v2664
        %v2666 = vsel %vm902, %v2639, 0.0
        %v2667 = vadd.f32 %v2665, %v2666
        %v2668 = vmul.f32 %v694, %v2561
        %v2669 = vmul.f32 %v695, %v2563
        %v2670 = vmul.f32 %v696, %v2565
        %v2671 = vmul.f32 %v697, %v2567
        %v2672 = vmul.f32 %v698, %v2569
        %v2673 = vmul.f32 %v699, %v2571
        %v2674 = vmul.f32 %v700, %v2573
        %v2675 = vmul.f32 %v701, %v2575
        %v2676 = vmul.f32 %v702, %v2577
        %v2677 = vmul.f32 %v703, %v2579
        %v2678 = vmul.f32 %v704, %v2581
        %v2679 = vmul.f32 %v705, %v2583
        %v2680 = vmul.f32 %v706, %v2585
        %v2681 = vmul.f32 %v707, %v2587
        %v2682 = vmul.f32 %v708, %v2589
        %v2683 = vmul.f32 %v709, %v2591
        %v2684 = vmul.f32 %v710, %v2466
        %v2685 = vmul.f32 %v711, %v2469
        %v2686 = vmul.f32 %v712, %v2474
        %v2687 = vmul.f32 %v713, %v2477
        %v2688 = vmul.f32 %v714, %v2482
        %v2689 = vmul.f32 %v715, %v2485
        %v2690 = vmul.f32 %v716, %v2490
        %v2691 = vmul.f32 %v717, %v2493
        %v2692 = vmul.f32 %v718, %v2498
        %v2693 = vmul.f32 %v719, %v2501
        %v2694 = vmul.f32 %v720, %v2506
        %v2695 = vmul.f32 %v721, %v2509
        %v2696 = vmul.f32 %v722, %v2514
        %v2697 = vmul.f32 %v723, %v2517
        %v2698 = vmul.f32 %v724, %v2522
        %v2699 = vmul.f32 %v725, %v2525
        %v2700 = vsub.f32 %v2668, %v2684
        %v2701 = vsub.f32 %v2669, %v2685
        %v2702 = vsub.f32 %v2670, %v2686
        %v2703 = vsub.f32 %v2671, %v2687
        %v2704 = vsub.f32 %v2672, %v2688
        %v2705 = vsub.f32 %v2673, %v2689
        %v2706 = vsub.f32 %v2674, %v2690
        %v2707 = vsub.f32 %v2675, %v2691
        %v2708 = vsub.f32 %v2676, %v2692
        %v2709 = vsub.f32 %v2677, %v2693
        %v2710 = vsub.f32 %v2678, %v2694
        %v2711 = vsub.f32 %v2679, %v2695
        %v2712 = vsub.f32 %v2680, %v2696
        %v2713 = vsub.f32 %v2681, %v2697
        %v2714 = vsub.f32 %v2682, %v2698
        %v2715 = vsub.f32 %v2683, %v2699
        %v2716 = vsel %vm902, %v2700, 0.0
        %v2717 = vsel %vm902, %v2704, 0.0
        %v2718 = vadd.f32 %v2716, %v2717
        %v2719 = vsel %vm902, %v2708, 0.0
        %v2720 = vadd.f32 %v2718, %v2719
        %v2721 = vsel %vm902, %v2712, 0.0
        %v2722 = vadd.f32 %v2720, %v2721
        %v2723 = vsel %vm902, %v2701, 0.0
        %v2724 = vsel %vm902, %v2705, 0.0
        %v2725 = vadd.f32 %v2723, %v2724
        %v2726 = vsel %vm902, %v2709, 0.0
        %v2727 = vadd.f32 %v2725, %v2726
        %v2728 = vsel %vm902, %v2713, 0.0
        %v2729 = vadd.f32 %v2727, %v2728
        %v2730 = vsel %vm902, %v2702, 0.0
        %v2731 = vsel %vm902, %v2706, 0.0
        %v2732 = vadd.f32 %v2730, %v2731
        %v2733 = vsel %vm902, %v2710, 0.0
        %v2734 = vadd.f32 %v2732, %v2733
        %v2735 = vsel %vm902, %v2714, 0.0
        %v2736 = vadd.f32 %v2734, %v2735
        %v2737 = vsel %vm902, %v2703, 0.0
        %v2738 = vsel %vm902, %v2707, 0.0
        %v2739 = vadd.f32 %v2737, %v2738
        %v2740 = vsel %vm902, %v2711, 0.0
        %v2741 = vadd.f32 %v2739, %v2740
        %v2742 = vsel %vm902, %v2715, 0.0
        %v2743 = vadd.f32 %v2741, %v2742
        %p2744 = scmp.eq.s32.totalorder %s46, 0
        // Predicated region
        $region93: #{tpu_custom_call.1} parent=55 // pred_check
          %p2745 = pneg %p2744
        $region94: #{tpu_custom_call.1} parent=55 // pred_check_branch
          %2747 = sbr.rel (%p2745) target = $region96
        $region95: #{tpu_custom_call.1} parent=55 // pred_region
          %v2748 = vmul.f32 %v2646, 0.5
          %v2749 = vmul.f32 %v2653, 0.5
          %v2750 = vmul.f32 %v2660, 0.5
          %v2751 = vmul.f32 %v2667, 0.5
          %v2752 = vsub.f32 %v686, %v2748
          %v2753 = vsub.f32 %v687, %v2749
          %v2754 = vsub.f32 %v688, %v2750
          %v2755 = vsub.f32 %v689, %v2751
          %2756 = vst.msk [vmem:[%s673] sm:$0xff] %vm902, %v2752
          %2757 = vst.msk [vmem:[%s673 + $0x8] sm:$0xff] %vm902, %v2753
          %2758 = vst.msk [vmem:[%s673 + $0x10] sm:$0xff] %vm902, %v2754
          %2759 = vst.msk [vmem:[%s673 + $0x18] sm:$0xff] %vm902, %v2755
          %v2760 = vmul.f32 %v2722, 0.5
          %v2761 = vmul.f32 %v2729, 0.5
          %v2762 = vmul.f32 %v2736, 0.5
          %v2763 = vmul.f32 %v2743, 0.5
          %v2764 = vsub.f32 %v690, %v2760
          %v2765 = vsub.f32 %v691, %v2761
          %v2766 = vsub.f32 %v692, %v2762
          %v2767 = vsub.f32 %v693, %v2763
          %2768 = vst.msk [vmem:[%s680] sm:$0xff] %vm902, %v2764
          %2769 = vst.msk [vmem:[%s680 + $0x8] sm:$0xff] %vm902, %v2765
          %2770 = vst.msk [vmem:[%s680 + $0x10] sm:$0xff] %vm902, %v2766
          %2771 = vst.msk [vmem:[%s680 + $0x18] sm:$0xff] %vm902, %v2767
        $region96: #{tpu_custom_call.1} parent=55 // pred_fallthru
          _
        %p2772 = scmp.gt.s32.totalorder %s46, 0
        // Predicated region
        $region97: #{tpu_custom_call.1} parent=55 // pred_check
          %p2773 = pneg %p2772
        $region98: #{tpu_custom_call.1} parent=55 // pred_check_branch
          %2775 = sbr.rel (%p2773) target = $region100
        $region99: #{tpu_custom_call.1} parent=55 // pred_region
          %v2776 = vld [vmem:[%s673] sm:$0xff]
          %v2777 = vld [vmem:[%s673 + $0x8] sm:$0xff]
          %v2778 = vld [vmem:[%s673 + $0x10] sm:$0xff]
          %v2779 = vld [vmem:[%s673 + $0x18] sm:$0xff]
          %v2780 = vmul.f32 %v2646, 0.5
          %v2781 = vmul.f32 %v2653, 0.5
          %v2782 = vmul.f32 %v2660, 0.5
          %v2783 = vmul.f32 %v2667, 0.5
          %v2784 = vsub.f32 %v2776, %v2780
          %v2785 = vsub.f32 %v2777, %v2781
          %v2786 = vsub.f32 %v2778, %v2782
          %v2787 = vsub.f32 %v2779, %v2783
          %2788 = vst.msk [vmem:[%s673] sm:$0xff] %vm902, %v2784
          %2789 = vst.msk [vmem:[%s673 + $0x8] sm:$0xff] %vm902, %v2785
          %2790 = vst.msk [vmem:[%s673 + $0x10] sm:$0xff] %vm902, %v2786
          %2791 = vst.msk [vmem:[%s673 + $0x18] sm:$0xff] %vm902, %v2787
          %v2792 = vld [vmem:[%s680] sm:$0xff]
          %v2793 = vld [vmem:[%s680 + $0x8] sm:$0xff]
          %v2794 = vld [vmem:[%s680 + $0x10] sm:$0xff]
          %v2795 = vld [vmem:[%s680 + $0x18] sm:$0xff]
          %v2796 = vmul.f32 %v2722, 0.5
          %v2797 = vmul.f32 %v2729, 0.5
          %v2798 = vmul.f32 %v2736, 0.5
          %v2799 = vmul.f32 %v2743, 0.5
          %v2800 = vsub.f32 %v2792, %v2796
          %v2801 = vsub.f32 %v2793, %v2797
          %v2802 = vsub.f32 %v2794, %v2798
          %v2803 = vsub.f32 %v2795, %v2799
          %2804 = vst.msk [vmem:[%s680] sm:$0xff] %vm902, %v2800
          %2805 = vst.msk [vmem:[%s680 + $0x8] sm:$0xff] %vm902, %v2801
          %2806 = vst.msk [vmem:[%s680 + $0x10] sm:$0xff] %vm902, %v2802
          %2807 = vst.msk [vmem:[%s680 + $0x18] sm:$0xff] %vm902, %v2803
        $region100: #{tpu_custom_call.1} parent=55 // pred_fallthru
          _
        %s2808 = sand.u32 %s293, 1
        %s2809 = scalar_lea.sflag [#allocation4], %s2808
        %s2810 = sand.u32 %s293, 1
        %s2811 = smul.addr %s2810, 32
        %s2812 = scalar_lea.vmem [#allocation17], %s2811
        %s2813 = sand.u32 %s319, 1
        %s2814 = scalar_lea.sflag [#allocation19], %s2813
        %s2815 = sand.u32 %s319, 1
        %s2816 = smul.addr %s2815, 32
        %s2817 = scalar_lea.vmem [#allocation18], %s2816
        // Predicated region
        $region101: #{tpu_custom_call.1} parent=55 // pred_check
          %p2818 = pneg %p303
        $region102: #{tpu_custom_call.1} parent=55 // pred_check_branch
          %2820 = sbr.rel (%p2818) target = $region104
        $region103: #{tpu_custom_call.1} parent=55 // pred_region
          %s2822 = ssub.s32 512, 512
          %2823 = vsyncadd %s2809, %s2822
          %s2824 = smul.addr %s45, 4
          %s2825 = smul.addr %s2824, 128
          %s2826 = scalar_lea.hbm %s9, %s2825
          %s2827 = sshll.u32 %s2812, 4
          %s2828 = int_to_ptr.vmem [resolvable:$true] %s2827
          %2833 = dma.vmem_to_hbm [thread:$0]  %s2828, 512, %s2826, %s2809, 128, 128, 8
        $region104: #{tpu_custom_call.1} parent=55 // pred_fallthru
          _
        // Predicated region
        $region105: #{tpu_custom_call.1} parent=55 // pred_check
          %p2834 = pneg %p329
        $region106: #{tpu_custom_call.1} parent=55 // pred_check_branch
          %2836 = sbr.rel (%p2834) target = $region108
        $region107: #{tpu_custom_call.1} parent=55 // pred_region
          %s2838 = ssub.s32 512, 512
          %2839 = vsyncadd %s2814, %s2838
          %s2840 = smul.addr %s45, 4
          %s2841 = smul.addr %s2840, 128
          %s2842 = scalar_lea.hbm %s10, %s2841
          %s2843 = sshll.u32 %s2817, 4
          %s2844 = int_to_ptr.vmem [resolvable:$true] %s2843
          %2849 = dma.vmem_to_hbm [thread:$0]  %s2844, 512, %s2842, %s2814, 128, 128, 8
        $region108: #{tpu_custom_call.1} parent=55 // pred_fallthru
          _
      $region56: #{tpu_custom_call.1} parent=5 // pred_fallthru
        _
      %p2850 = scmp.le.s32.totalorder 2, %s36
      // Predicated region
      $region109: #{tpu_custom_call.1} parent=5 // pred_check
        %p2851 = pneg %p2850
      $region110: #{tpu_custom_call.1} parent=5 // pred_check_branch
        %2853 = sbr.rel (%p2851) target = $region112
      $region111: #{tpu_custom_call.1} parent=5 // pred_region
        %s2854 = ssub.s32 %s36, 2
        // Predicated region
        $region113: #{tpu_custom_call.1} parent=111 // pred_check
          %p2855 = pneg %p309
        $region114: #{tpu_custom_call.1} parent=111 // pred_check_branch
          %2857 = sbr.rel (%p2855) target = $region116
        $region115: #{tpu_custom_call.1} parent=111 // pred_region
          %s2858 = sand.u32 %s294, 1
          %s2859 = scalar_lea.sflag [#allocation4], %s2858
          %s2860 = sand.u32 %s294, 1
          %s2861 = smul.addr %s2860, 32
          %s2862 = scalar_lea.vmem [#allocation17], %s2861
          %2863 = dma.done %s2859, 512
        $region116: #{tpu_custom_call.1} parent=111 // pred_fallthru
          _
        // Predicated region
        $region117: #{tpu_custom_call.1} parent=111 // pred_check
          %p2864 = pneg %p335
        $region118: #{tpu_custom_call.1} parent=111 // pred_check_branch
          %2866 = sbr.rel (%p2864) target = $region120
        $region119: #{tpu_custom_call.1} parent=111 // pred_region
          %s2867 = sand.u32 %s320, 1
          %s2868 = scalar_lea.sflag [#allocation19], %s2867
          %s2869 = sand.u32 %s320, 1
          %s2870 = smul.addr %s2869, 32
          %s2871 = scalar_lea.vmem [#allocation18], %s2870
          %2872 = dma.done %s2868, 512
        $region120: #{tpu_custom_call.1} parent=111 // pred_fallthru
          _
      $region112: #{tpu_custom_call.1} parent=5 // pred_fallthru
        _
    $region6: #{tpu_custom_call.1} parent=1 // loop_footer
      %s40 = sadd.s32 1, %s36
    $region7: #{tpu_custom_call.1} parent=1 // loop_footer_branch
      %35 = sbr.rel target = $region3
    $region8: #{tpu_custom_call.1} parent=1 // loop_exit
      _
    %2873 = vsyncpa [#allocation3], 1
    %s2874 = scalar_lea.sflag [#allocation3], 1
    %2875 = vsyncpa %s2874, 1
    %2876 = vsyncpa [#allocation6], 1
    %s2877 = scalar_lea.sflag [#allocation6], 1
    %2878 = vsyncpa %s2877, 1
    %2879 = vsyncpa [#allocation9], 1
    %s2880 = scalar_lea.sflag [#allocation9], 1
    %2881 = vsyncpa %s2880, 1
    %2882 = vsyncpa [#allocation12], 1
    %s2883 = scalar_lea.sflag [#allocation12], 1
    %2884 = vsyncpa %s2883, 1
    %2885 = vsyncpa [#allocation15], 1
    %2886 = vsyncpa [#allocation4], 1
    %s2887 = scalar_lea.sflag [#allocation4], 1
    %2888 = vsyncpa %s2887, 1
    %2889 = vsyncpa [#allocation19], 1
    %s2890 = scalar_lea.sflag [#allocation19], 1
    %2891 = vsyncpa %s2890, 1

</llo_original>
